<compile_context>
chip_gen: v6e
topology: v6e:2x2x1
jax: 0.10.0
libtpu: 0.0.40
codegen_flags: <defaults>
</compile_context>

<pallas_src>
import functools

import jax
import jax.numpy as jnp
from jax.experimental import pallas as pl
from jax.experimental.pallas import tpu as pltpu


def _pick_row_tile(H):
    for th in (8, 4, 2):
        if H % th == 0:
            return th
    return 1


# ----------------------------------------------------------------------------
# One row-tile of a dilated 3x3 conv + ReLU (+ optional fused residual sum).
# ----------------------------------------------------------------------------
def _dilated_conv_kernel(x_ref, w_ref, b_ref, *rest, H, W, C, d, TH, n_res):
    # x_ref : (1, H, W, C)   full conv-input image (DMA elided across row tiles)
    # w_ref : (3, 3, C, C)   HWIO weights in compute dtype (bf16)
    # b_ref : (1, C)         f32 bias
    # rest  : n_res residual row tiles (1, TH, W, C), then o_ref (1, TH, W, C),
    #         then xs_ref scratch (3, (H + 2d) * W, C) in compute dtype.
    res_refs = rest[:n_res]
    o_ref = rest[n_res]
    xs_ref = rest[n_res + 1]

    hi = pl.program_id(1)
    Hp = H + 2 * d
    cdt = xs_ref.dtype  # compute (matmul) dtype

    # ---- once per image: build 3 column-shifted, row-zero-padded copies ----
    @pl.when(hi == 0)
    def _build_shifted():
        x_img = x_ref[0]                                   # (H, W, C)
        zero_halo = jnp.zeros((d * W, C), cdt)
        for kx in range(3):
            dx = (kx - 1) * d
            if dx >= W or dx <= -W:                        # taps fully off-image
                shifted = jnp.zeros((H, W, C), x_img.dtype)
            elif dx == 0:
                shifted = x_img
            elif dx > 0:
                pad = jnp.zeros((H, dx, C), x_img.dtype)
                shifted = jnp.concatenate([x_img[:, dx:, :], pad], axis=1)
            else:
                pad = jnp.zeros((H, -dx, C), x_img.dtype)
                shifted = jnp.concatenate([pad, x_img[:, :W + dx, :]], axis=1)
            xs_ref[kx, 0:d * W, :] = zero_halo
            xs_ref[kx, d * W:(d + H) * W, :] = (
                shifted.reshape(H * W, C).astype(cdt))
            xs_ref[kx, (d + H) * W:Hp * W, :] = zero_halo

    # ---- this row tile: 9 channel-contraction matmuls on the MXU ----
    r0 = pl.multiple_of(hi * TH, TH)
    # Accumulator initialized with the broadcast bias (saves one VPU pass).
    acc = jnp.broadcast_to(b_ref[...].astype(jnp.float32), (TH * W, C))
    for ky in range(3):
        row_start = (r0 + ky * d) * W    # always in-bounds of the padded scratch
        if W % 8 == 0:
            row_start = pl.multiple_of(row_start, 8)
        for kx in range(3):
            patch = xs_ref[kx, pl.ds(row_start, TH * W), :]      # (TH*W, C) bf16
            acc = acc + jnp.dot(patch, w_ref[ky, kx],
                                preferred_element_type=jnp.float32)

    y = jnp.maximum(acc, 0.0).reshape(TH, W, C)                  # ReLU in f32

    if n_res:
        # Fused residual: out = x + d1 + d2 + d3 + d4 + relu(conv_d16(d4)).
        resid = x_ref[0, pl.ds(r0, TH), :, :].astype(jnp.float32)   # d4 chunk
        for rref in res_refs:
            resid = resid + rref[0].astype(jnp.float32)
        y = y + resid

    o_ref[...] = y.reshape(1, TH, W, C).astype(o_ref.dtype)


def dilated_conv_relu(x_nhwc, w_hwio, bias, dilation, residuals=(),
                      compute_dtype=jnp.bfloat16):
    N, H, W, C = x_nhwc.shape
    d = dilation
    TH = _pick_row_tile(H)
    HT = H // TH
    n_res = len(residuals)

    w_c = w_hwio.astype(compute_dtype)
    b2 = bias.reshape(1, C).astype(jnp.float32)

    kernel = functools.partial(_dilated_conv_kernel,
                               H=H, W=W, C=C, d=d, TH=TH, n_res=n_res)

    row_tile_spec = pl.BlockSpec((1, TH, W, C), lambda n, hi: (n, hi, 0, 0))
    in_specs = [
        # Full image; constant block index over `hi` -> DMA elided per row tile.
        pl.BlockSpec((1, H, W, C), lambda n, hi: (n, 0, 0, 0)),
        # Weights / bias: constant index maps -> copied once.
        pl.BlockSpec((3, 3, C, C), lambda n, hi: (0, 0, 0, 0)),
        pl.BlockSpec((1, C), lambda n, hi: (0, 0)),
    ] + [row_tile_spec] * n_res

    return pl.pallas_call(
        kernel,
        out_shape=jax.ShapeDtypeStruct((N, H, W, C), x_nhwc.dtype),
        grid_spec=pltpu.PrefetchScalarGridSpec(
            num_scalar_prefetch=0,
            grid=(N, HT),
            in_specs=in_specs,
            out_specs=row_tile_spec,
            scratch_shapes=[pltpu.VMEM((3, (H + 2 * d) * W, C), compute_dtype)],
        ),
        compiler_params=pltpu.CompilerParams(
            # N is megacore-parallel; the row axis is sequential because the
            # shifted-image scratch is built at hi == 0 and reused across it.
            dimension_semantics=("parallel", "arbitrary"),
            vmem_limit_bytes=64 * 1024 * 1024,
        ),
    )(x_nhwc, w_c, b2, *residuals)


# ----------------------------------------------------------------------------
# Full module forward.
# ----------------------------------------------------------------------------
def dblock_more_dilate(x_nchw, weights_hwio, biases, compute_dtype=jnp.bfloat16):
    """weights_hwio: 5 arrays (3,3,C,C); biases: 5 arrays (C,)."""
    x = jnp.transpose(x_nchw, (0, 2, 3, 1))  # NCHW -> NHWC
    d1 = dilated_conv_relu(x,  weights_hwio[0], biases[0], 1,  compute_dtype=compute_dtype)
    d2 = dilated_conv_relu(d1, weights_hwio[1], biases[1], 2,  compute_dtype=compute_dtype)
    d3 = dilated_conv_relu(d2, weights_hwio[2], biases[2], 4,  compute_dtype=compute_dtype)
    d4 = dilated_conv_relu(d3, weights_hwio[3], biases[3], 8,  compute_dtype=compute_dtype)
    # Last conv fuses the residual sum: out = x + d1 + d2 + d3 + d4 + d5.
    out = dilated_conv_relu(d4, weights_hwio[4], biases[4], 16,
                            residuals=(x, d1, d2, d3),
                            compute_dtype=compute_dtype)
    return jnp.transpose(out, (0, 3, 1, 2))  # NHWC -> NCHW


# ----------------------------------------------------------------------------
# Pure-JAX reference (lax conv, f32) for the correctness check.
# ----------------------------------------------------------------------------
def _ref_conv_relu(x_nchw, w_oihw, bias, d):
    y = jax.lax.conv_general_dilated(
        x_nchw, w_oihw,
        window_strides=(1, 1),
        padding=((d, d), (d, d)),
        rhs_dilation=(d, d),
        dimension_numbers=("NCHW", "OIHW", "NCHW"),
    )
    return jnp.maximum(y + bias[None, :, None, None], 0.0)


def _ref_forward(x, ws_oihw, bs):
    d1 = _ref_conv_relu(x, ws_oihw[0], bs[0], 1)
    d2 = _ref_conv_relu(d1, ws_oihw[1], bs[1], 2)
    d3 = _ref_conv_relu(d2, ws_oihw[2], bs[2], 4)
    d4 = _ref_conv_relu(d3, ws_oihw[3], bs[3], 8)
    d5 = _ref_conv_relu(d4, ws_oihw[4], bs[4], 16)
    return x + d1 + d2 + d3 + d4 + d5


if __name__ == "__main__":
    N, C, H, W = 2, 4, 16, 16
    key = jax.random.PRNGKey(0)
    k_x, *k_w = jax.random.split(key, 6)

    x = jax.random.normal(k_x, (N, C, H, W), dtype=jnp.float32)

    # Conv2d weights in PyTorch OIHW layout; biases zeroed per module __init__.
    weights_oihw = [0.1 * jax.random.normal(k_w[i], (C, C, 3, 3), dtype=jnp.float32)
                    for i in range(5)]
    biases = [jnp.zeros((C,), dtype=jnp.float32) for _ in range(5)]
    # OIHW -> HWIO for the NHWC kernels.
    weights_hwio = [jnp.transpose(w, (2, 3, 1, 0)) for w in weights_oihw]

    ref = _ref_forward(x, weights_oihw, biases)

    # Exactness check of the algorithm with f32 matmuls (same math as module).
    out_f32 = jax.block_until_ready(
        dblock_more_dilate(x, weights_hwio, biases, compute_dtype=jnp.float32))
    assert out_f32.shape == (N, C, H, W) and out_f32.dtype == jnp.float32
    assert jnp.allclose(out_f32, ref, atol=1e-4, rtol=1e-4), "f32 path mismatch"

    # Fast path: bf16 MXU operands, f32 accumulation (looser tolerance covers
    # the bf16 quantization of activations/weights requested by the review).
    out = jax.block_until_ready(dblock_more_dilate(x, weights_hwio, biases))
    assert out.shape == (N, C, H, W) and out.dtype == jnp.float32
    assert jnp.allclose(out, ref, atol=5e-2, rtol=5e-2), "bf16 path mismatch"

    print("KERNEL_OK")
</pallas_src>

<mosaic_0001>
module attributes {stable_mosaic.version = 11 : i64} {
  func.func @_dilated_conv_kernel(%arg0: i32, %arg1: i32, %arg2: memref<1x16x16x4xf32, #tpu.memory_space<vmem>>, %arg3: memref<3x3x4x4xf32, #tpu.memory_space<vmem>>, %arg4: memref<1x4xf32, #tpu.memory_space<vmem>>, %arg5: memref<1x8x16x4xf32, #tpu.memory_space<vmem>>, %arg6: memref<3x288x4xf32, #tpu.memory_space<vmem>>) attributes {dimension_semantics = [#tpu.dimension_semantics<parallel>, #tpu.dimension_semantics<arbitrary>], iteration_bounds = array<i64: 2, 2>, scalar_prefetch = 0 : i64, scratch_operands = 1 : i64, tpu.core_type = #tpu.core_type<tc>, window_params = [{transform_indices = @transform_0, window_bounds = array<i64: 1, 16, 16, 4>}, {pipeline_mode = #tpu.pipeline_mode<synchronous>, transform_indices = @transform_1, window_bounds = array<i64: 3, 3, 4, 4>}, {pipeline_mode = #tpu.pipeline_mode<synchronous>, transform_indices = @transform_2, window_bounds = array<i64: 1, 4>}, {transform_indices = @transform_3, window_bounds = array<i64: 1, 8, 16, 4>}]} {
    %c0_i32 = arith.constant 0 : i32
    %0 = arith.cmpi eq, %arg1, %c0_i32 : i32
    %1 = arith.extui %0 : i1 to i32
    %c0_i32_0 = arith.constant 0 : i32
    %2 = arith.cmpi ne, %1, %c0_i32_0 : i32
    scf.if %2 {
      %c0_70 = arith.constant 0 : index
      %c0_71 = arith.constant 0 : index
      %c0_72 = arith.constant 0 : index
      %c0_73 = arith.constant 0 : index
      %85 = vector.load %arg2[%c0_70, %c0_71, %c0_72, %c0_73] : memref<1x16x16x4xf32, #tpu.memory_space<vmem>>, vector<1x16x16x4xf32>
      %86 = vector.shape_cast %85 : vector<1x16x16x4xf32> to vector<16x16x4xf32>
      %cst_74 = arith.constant 0.000000e+00 : f32
      %87 = vector.broadcast %cst_74 : f32 to vector<16x4xf32>
      %cst_75 = arith.constant 0.000000e+00 : f32
      %88 = vector.broadcast %cst_75 : f32 to vector<16x1x4xf32>
      %89 = vector.extract_strided_slice %86 {offsets = [0, 0, 0], sizes = [16, 15, 4], strides = [1, 1, 1]} : vector<16x16x4xf32> to vector<16x15x4xf32>
      %90 = tpu.concatenate %88, %89 in 1 : vector<16x1x4xf32>, vector<16x15x4xf32> -> vector<16x16x4xf32>
      %c0_76 = arith.constant 0 : index
      %c0_77 = arith.constant 0 : index
      %c0_78 = arith.constant 0 : index
      %91 = vector.load %arg6[%c0_76, %c0_77, %c0_78] : memref<3x288x4xf32, #tpu.memory_space<vmem>>, vector<1x16x4xf32>
      %92 = vector.shape_cast %91 : vector<1x16x4xf32> to vector<16x4xf32>
      %93 = vector.shape_cast %87 : vector<16x4xf32> to vector<1x16x4xf32>
      tpu.vector_store %arg6[%c0_76, %c0_77, %c0_78], %93 {strides = array<i32>} : memref<3x288x4xf32, #tpu.memory_space<vmem>>, vector<1x16x4xf32>,
      %94 = vector.shape_cast %90 : vector<16x16x4xf32> to vector<256x4xf32>
      %c0_79 = arith.constant 0 : index
      %c16 = arith.constant 16 : index
      %c0_80 = arith.constant 0 : index
      %95 = vector.load %arg6[%c0_79, %c16, %c0_80] : memref<3x288x4xf32, #tpu.memory_space<vmem>>, vector<1x256x4xf32>
      %96 = vector.shape_cast %95 : vector<1x256x4xf32> to vector<256x4xf32>
      %97 = vector.shape_cast %94 : vector<256x4xf32> to vector<1x256x4xf32>
      tpu.vector_store %arg6[%c0_79, %c16, %c0_80], %97 {strides = array<i32>} : memref<3x288x4xf32, #tpu.memory_space<vmem>>, vector<1x256x4xf32>,
      %c0_81 = arith.constant 0 : index
      %c272 = arith.constant 272 : index
      %c0_82 = arith.constant 0 : index
      %98 = vector.load %arg6[%c0_81, %c272, %c0_82] : memref<3x288x4xf32, #tpu.memory_space<vmem>>, vector<1x16x4xf32>
      %99 = vector.shape_cast %98 : vector<1x16x4xf32> to vector<16x4xf32>
      %100 = vector.shape_cast %87 : vector<16x4xf32> to vector<1x16x4xf32>
      tpu.vector_store %arg6[%c0_81, %c272, %c0_82], %100 {strides = array<i32>} : memref<3x288x4xf32, #tpu.memory_space<vmem>>, vector<1x16x4xf32>,
      %c1_83 = arith.constant 1 : index
      %c0_84 = arith.constant 0 : index
      %c0_85 = arith.constant 0 : index
      %101 = vector.load %arg6[%c1_83, %c0_84, %c0_85] : memref<3x288x4xf32, #tpu.memory_space<vmem>>, vector<1x16x4xf32>
      %102 = vector.shape_cast %101 : vector<1x16x4xf32> to vector<16x4xf32>
      %103 = vector.shape_cast %87 : vector<16x4xf32> to vector<1x16x4xf32>
      tpu.vector_store %arg6[%c1_83, %c0_84, %c0_85], %103 {strides = array<i32>} : memref<3x288x4xf32, #tpu.memory_space<vmem>>, vector<1x16x4xf32>,
      %104 = vector.shape_cast %86 : vector<16x16x4xf32> to vector<256x4xf32>
      %c1_86 = arith.constant 1 : index
      %c16_87 = arith.constant 16 : index
      %c0_88 = arith.constant 0 : index
      %105 = vector.load %arg6[%c1_86, %c16_87, %c0_88] : memref<3x288x4xf32, #tpu.memory_space<vmem>>, vector<1x256x4xf32>
      %106 = vector.shape_cast %105 : vector<1x256x4xf32> to vector<256x4xf32>
      %107 = vector.shape_cast %104 : vector<256x4xf32> to vector<1x256x4xf32>
      tpu.vector_store %arg6[%c1_86, %c16_87, %c0_88], %107 {strides = array<i32>} : memref<3x288x4xf32, #tpu.memory_space<vmem>>, vector<1x256x4xf32>,
      %c1_89 = arith.constant 1 : index
      %c272_90 = arith.constant 272 : index
      %c0_91 = arith.constant 0 : index
      %108 = vector.load %arg6[%c1_89, %c272_90, %c0_91] : memref<3x288x4xf32, #tpu.memory_space<vmem>>, vector<1x16x4xf32>
      %109 = vector.shape_cast %108 : vector<1x16x4xf32> to vector<16x4xf32>
      %110 = vector.shape_cast %87 : vector<16x4xf32> to vector<1x16x4xf32>
      tpu.vector_store %arg6[%c1_89, %c272_90, %c0_91], %110 {strides = array<i32>} : memref<3x288x4xf32, #tpu.memory_space<vmem>>, vector<1x16x4xf32>,
      %cst_92 = arith.constant 0.000000e+00 : f32
      %111 = vector.broadcast %cst_92 : f32 to vector<16x1x4xf32>
      %112 = vector.extract_strided_slice %86 {offsets = [0, 1, 0], sizes = [16, 15, 4], strides = [1, 1, 1]} : vector<16x16x4xf32> to vector<16x15x4xf32>
      %113 = tpu.concatenate %112, %111 in 1 : vector<16x15x4xf32>, vector<16x1x4xf32> -> vector<16x16x4xf32>
      %c2_93 = arith.constant 2 : index
      %c0_94 = arith.constant 0 : index
      %c0_95 = arith.constant 0 : index
      %114 = vector.load %arg6[%c2_93, %c0_94, %c0_95] : memref<3x288x4xf32, #tpu.memory_space<vmem>>, vector<1x16x4xf32>
      %115 = vector.shape_cast %114 : vector<1x16x4xf32> to vector<16x4xf32>
      %116 = vector.shape_cast %87 : vector<16x4xf32> to vector<1x16x4xf32>
      tpu.vector_store %arg6[%c2_93, %c0_94, %c0_95], %116 {strides = array<i32>} : memref<3x288x4xf32, #tpu.memory_space<vmem>>, vector<1x16x4xf32>,
      %117 = vector.shape_cast %113 : vector<16x16x4xf32> to vector<256x4xf32>
      %c2_96 = arith.constant 2 : index
      %c16_97 = arith.constant 16 : index
      %c0_98 = arith.constant 0 : index
      %118 = vector.load %arg6[%c2_96, %c16_97, %c0_98] : memref<3x288x4xf32, #tpu.memory_space<vmem>>, vector<1x256x4xf32>
      %119 = vector.shape_cast %118 : vector<1x256x4xf32> to vector<256x4xf32>
      %120 = vector.shape_cast %117 : vector<256x4xf32> to vector<1x256x4xf32>
      tpu.vector_store %arg6[%c2_96, %c16_97, %c0_98], %120 {strides = array<i32>} : memref<3x288x4xf32, #tpu.memory_space<vmem>>, vector<1x256x4xf32>,
      %c2_99 = arith.constant 2 : index
      %c272_100 = arith.constant 272 : index
      %c0_101 = arith.constant 0 : index
      %121 = vector.load %arg6[%c2_99, %c272_100, %c0_101] : memref<3x288x4xf32, #tpu.memory_space<vmem>>, vector<1x16x4xf32>
      %122 = vector.shape_cast %121 : vector<1x16x4xf32> to vector<16x4xf32>
      %123 = vector.shape_cast %87 : vector<16x4xf32> to vector<1x16x4xf32>
      tpu.vector_store %arg6[%c2_99, %c272_100, %c0_101], %123 {strides = array<i32>} : memref<3x288x4xf32, #tpu.memory_space<vmem>>, vector<1x16x4xf32>,
    } else {
    }
    %c8_i32 = arith.constant 8 : i32
    %3 = arith.muli %arg1, %c8_i32 : i32
    %4 = tpu.assume_multiple %3, 8 : i32
    %c0 = arith.constant 0 : index
    %c0_1 = arith.constant 0 : index
    %5 = vector.load %arg4[%c0, %c0_1] : memref<1x4xf32, #tpu.memory_space<vmem>>, vector<1x4xf32>
    %6 = vector.shape_cast %5 : vector<1x4xf32> to vector<1x4xf32>
    %7 = vector.broadcast %6 : vector<1x4xf32> to vector<128x4xf32>
    %c0_i32_2 = arith.constant 0 : i32
    %8 = arith.addi %4, %c0_i32_2 : i32
    %c16_i32 = arith.constant 16 : i32
    %9 = arith.muli %8, %c16_i32 : i32
    %10 = tpu.assume_multiple %9, 8 : i32
    %c0_3 = arith.constant 0 : index
    %11 = arith.index_cast %10 : i32 to index
    %c0_4 = arith.constant 0 : index
    %12 = vector.load %arg6[%c0_3, %11, %c0_4] : memref<3x288x4xf32, #tpu.memory_space<vmem>>, vector<1x128x4xf32>
    %13 = vector.shape_cast %12 : vector<1x128x4xf32> to vector<128x4xf32>
    %c0_5 = arith.constant 0 : index
    %c0_6 = arith.constant 0 : index
    %c0_7 = arith.constant 0 : index
    %c0_8 = arith.constant 0 : index
    %14 = vector.load %arg3[%c0_5, %c0_6, %c0_7, %c0_8] : memref<3x3x4x4xf32, #tpu.memory_space<vmem>>, vector<1x1x4x4xf32>
    %15 = vector.shape_cast %14 : vector<1x1x4x4xf32> to vector<4x4xf32>
    %cst = arith.constant dense<0.000000e+00> : vector<128x4xf32>
    %16 = tpu.matmul %13, %15, %cst {dimension_numbers = #tpu.dot_dimension_numbers<[1], [0], [0], [1], [0, 0, 1, 1], [], []>} : vector<128x4xf32>, vector<4x4xf32>, vector<128x4xf32> -> vector<128x4xf32>
    %17 = arith.addf %7, %16 : vector<128x4xf32>
    %c1 = arith.constant 1 : index
    %18 = arith.index_cast %10 : i32 to index
    %c0_9 = arith.constant 0 : index
    %19 = vector.load %arg6[%c1, %18, %c0_9] : memref<3x288x4xf32, #tpu.memory_space<vmem>>, vector<1x128x4xf32>
    %20 = vector.shape_cast %19 : vector<1x128x4xf32> to vector<128x4xf32>
    %c0_10 = arith.constant 0 : index
    %c1_11 = arith.constant 1 : index
    %c0_12 = arith.constant 0 : index
    %c0_13 = arith.constant 0 : index
    %21 = vector.load %arg3[%c0_10, %c1_11, %c0_12, %c0_13] : memref<3x3x4x4xf32, #tpu.memory_space<vmem>>, vector<1x1x4x4xf32>
    %22 = vector.shape_cast %21 : vector<1x1x4x4xf32> to vector<4x4xf32>
    %cst_14 = arith.constant dense<0.000000e+00> : vector<128x4xf32>
    %23 = tpu.matmul %20, %22, %cst_14 {dimension_numbers = #tpu.dot_dimension_numbers<[1], [0], [0], [1], [0, 0, 1, 1], [], []>} : vector<128x4xf32>, vector<4x4xf32>, vector<128x4xf32> -> vector<128x4xf32>
    %24 = arith.addf %17, %23 : vector<128x4xf32>
    %c2 = arith.constant 2 : index
    %25 = arith.index_cast %10 : i32 to index
    %c0_15 = arith.constant 0 : index
    %26 = vector.load %arg6[%c2, %25, %c0_15] : memref<3x288x4xf32, #tpu.memory_space<vmem>>, vector<1x128x4xf32>
    %27 = vector.shape_cast %26 : vector<1x128x4xf32> to vector<128x4xf32>
    %c0_16 = arith.constant 0 : index
    %c2_17 = arith.constant 2 : index
    %c0_18 = arith.constant 0 : index
    %c0_19 = arith.constant 0 : index
    %28 = vector.load %arg3[%c0_16, %c2_17, %c0_18, %c0_19] : memref<3x3x4x4xf32, #tpu.memory_space<vmem>>, vector<1x1x4x4xf32>
    %29 = vector.shape_cast %28 : vector<1x1x4x4xf32> to vector<4x4xf32>
    %cst_20 = arith.constant dense<0.000000e+00> : vector<128x4xf32>
    %30 = tpu.matmul %27, %29, %cst_20 {dimension_numbers = #tpu.dot_dimension_numbers<[1], [0], [0], [1], [0, 0, 1, 1], [], []>} : vector<128x4xf32>, vector<4x4xf32>, vector<128x4xf32> -> vector<128x4xf32>
    %31 = arith.addf %24, %30 : vector<128x4xf32>
    %c1_i32 = arith.constant 1 : i32
    %32 = arith.addi %4, %c1_i32 : i32
    %c16_i32_21 = arith.constant 16 : i32
    %33 = arith.muli %32, %c16_i32_21 : i32
    %34 = tpu.assume_multiple %33, 8 : i32
    %c0_22 = arith.constant 0 : index
    %35 = arith.index_cast %34 : i32 to index
    %c0_23 = arith.constant 0 : index
    %36 = vector.load %arg6[%c0_22, %35, %c0_23] : memref<3x288x4xf32, #tpu.memory_space<vmem>>, vector<1x128x4xf32>
    %37 = vector.shape_cast %36 : vector<1x128x4xf32> to vector<128x4xf32>
    %c1_24 = arith.constant 1 : index
    %c0_25 = arith.constant 0 : index
    %c0_26 = arith.constant 0 : index
    %c0_27 = arith.constant 0 : index
    %38 = vector.load %arg3[%c1_24, %c0_25, %c0_26, %c0_27] : memref<3x3x4x4xf32, #tpu.memory_space<vmem>>, vector<1x1x4x4xf32>
    %39 = vector.shape_cast %38 : vector<1x1x4x4xf32> to vector<4x4xf32>
    %cst_28 = arith.constant dense<0.000000e+00> : vector<128x4xf32>
    %40 = tpu.matmul %37, %39, %cst_28 {dimension_numbers = #tpu.dot_dimension_numbers<[1], [0], [0], [1], [0, 0, 1, 1], [], []>} : vector<128x4xf32>, vector<4x4xf32>, vector<128x4xf32> -> vector<128x4xf32>
    %41 = arith.addf %31, %40 : vector<128x4xf32>
    %c1_29 = arith.constant 1 : index
    %42 = arith.index_cast %34 : i32 to index
    %c0_30 = arith.constant 0 : index
    %43 = vector.load %arg6[%c1_29, %42, %c0_30] : memref<3x288x4xf32, #tpu.memory_space<vmem>>, vector<1x128x4xf32>
    %44 = vector.shape_cast %43 : vector<1x128x4xf32> to vector<128x4xf32>
    %c1_31 = arith.constant 1 : index
    %c1_32 = arith.constant 1 : index
    %c0_33 = arith.constant 0 : index
    %c0_34 = arith.constant 0 : index
    %45 = vector.load %arg3[%c1_31, %c1_32, %c0_33, %c0_34] : memref<3x3x4x4xf32, #tpu.memory_space<vmem>>, vector<1x1x4x4xf32>
    %46 = vector.shape_cast %45 : vector<1x1x4x4xf32> to vector<4x4xf32>
    %cst_35 = arith.constant dense<0.000000e+00> : vector<128x4xf32>
    %47 = tpu.matmul %44, %46, %cst_35 {dimension_numbers = #tpu.dot_dimension_numbers<[1], [0], [0], [1], [0, 0, 1, 1], [], []>} : vector<128x4xf32>, vector<4x4xf32>, vector<128x4xf32> -> vector<128x4xf32>
    %48 = arith.addf %41, %47 : vector<128x4xf32>
    %c2_36 = arith.constant 2 : index
    %49 = arith.index_cast %34 : i32 to index
    %c0_37 = arith.constant 0 : index
    %50 = vector.load %arg6[%c2_36, %49, %c0_37] : memref<3x288x4xf32, #tpu.memory_space<vmem>>, vector<1x128x4xf32>
    %51 = vector.shape_cast %50 : vector<1x128x4xf32> to vector<128x4xf32>
    %c1_38 = arith.constant 1 : index
    %c2_39 = arith.constant 2 : index
    %c0_40 = arith.constant 0 : index
    %c0_41 = arith.constant 0 : index
    %52 = vector.load %arg3[%c1_38, %c2_39, %c0_40, %c0_41] : memref<3x3x4x4xf32, #tpu.memory_space<vmem>>, vector<1x1x4x4xf32>
    %53 = vector.shape_cast %52 : vector<1x1x4x4xf32> to vector<4x4xf32>
    %cst_42 = arith.constant dense<0.000000e+00> : vector<128x4xf32>
    %54 = tpu.matmul %51, %53, %cst_42 {dimension_numbers = #tpu.dot_dimension_numbers<[1], [0], [0], [1], [0, 0, 1, 1], [], []>} : vector<128x4xf32>, vector<4x4xf32>, vector<128x4xf32> -> vector<128x4xf32>
    %55 = arith.addf %48, %54 : vector<128x4xf32>
    %c2_i32 = arith.constant 2 : i32
    %56 = arith.addi %4, %c2_i32 : i32
    %c16_i32_43 = arith.constant 16 : i32
    %57 = arith.muli %56, %c16_i32_43 : i32
    %58 = tpu.assume_multiple %57, 8 : i32
    %c0_44 = arith.constant 0 : index
    %59 = arith.index_cast %58 : i32 to index
    %c0_45 = arith.constant 0 : index
    %60 = vector.load %arg6[%c0_44, %59, %c0_45] : memref<3x288x4xf32, #tpu.memory_space<vmem>>, vector<1x128x4xf32>
    %61 = vector.shape_cast %60 : vector<1x128x4xf32> to vector<128x4xf32>
    %c2_46 = arith.constant 2 : index
    %c0_47 = arith.constant 0 : index
    %c0_48 = arith.constant 0 : index
    %c0_49 = arith.constant 0 : index
    %62 = vector.load %arg3[%c2_46, %c0_47, %c0_48, %c0_49] : memref<3x3x4x4xf32, #tpu.memory_space<vmem>>, vector<1x1x4x4xf32>
    %63 = vector.shape_cast %62 : vector<1x1x4x4xf32> to vector<4x4xf32>
    %cst_50 = arith.constant dense<0.000000e+00> : vector<128x4xf32>
    %64 = tpu.matmul %61, %63, %cst_50 {dimension_numbers = #tpu.dot_dimension_numbers<[1], [0], [0], [1], [0, 0, 1, 1], [], []>} : vector<128x4xf32>, vector<4x4xf32>, vector<128x4xf32> -> vector<128x4xf32>
    %65 = arith.addf %55, %64 : vector<128x4xf32>
    %c1_51 = arith.constant 1 : index
    %66 = arith.index_cast %58 : i32 to index
    %c0_52 = arith.constant 0 : index
    %67 = vector.load %arg6[%c1_51, %66, %c0_52] : memref<3x288x4xf32, #tpu.memory_space<vmem>>, vector<1x128x4xf32>
    %68 = vector.shape_cast %67 : vector<1x128x4xf32> to vector<128x4xf32>
    %c2_53 = arith.constant 2 : index
    %c1_54 = arith.constant 1 : index
    %c0_55 = arith.constant 0 : index
    %c0_56 = arith.constant 0 : index
    %69 = vector.load %arg3[%c2_53, %c1_54, %c0_55, %c0_56] : memref<3x3x4x4xf32, #tpu.memory_space<vmem>>, vector<1x1x4x4xf32>
    %70 = vector.shape_cast %69 : vector<1x1x4x4xf32> to vector<4x4xf32>
    %cst_57 = arith.constant dense<0.000000e+00> : vector<128x4xf32>
    %71 = tpu.matmul %68, %70, %cst_57 {dimension_numbers = #tpu.dot_dimension_numbers<[1], [0], [0], [1], [0, 0, 1, 1], [], []>} : vector<128x4xf32>, vector<4x4xf32>, vector<128x4xf32> -> vector<128x4xf32>
    %72 = arith.addf %65, %71 : vector<128x4xf32>
    %c2_58 = arith.constant 2 : index
    %73 = arith.index_cast %58 : i32 to index
    %c0_59 = arith.constant 0 : index
    %74 = vector.load %arg6[%c2_58, %73, %c0_59] : memref<3x288x4xf32, #tpu.memory_space<vmem>>, vector<1x128x4xf32>
    %75 = vector.shape_cast %74 : vector<1x128x4xf32> to vector<128x4xf32>
    %c2_60 = arith.constant 2 : index
    %c2_61 = arith.constant 2 : index
    %c0_62 = arith.constant 0 : index
    %c0_63 = arith.constant 0 : index
    %76 = vector.load %arg3[%c2_60, %c2_61, %c0_62, %c0_63] : memref<3x3x4x4xf32, #tpu.memory_space<vmem>>, vector<1x1x4x4xf32>
    %77 = vector.shape_cast %76 : vector<1x1x4x4xf32> to vector<4x4xf32>
    %cst_64 = arith.constant dense<0.000000e+00> : vector<128x4xf32>
    %78 = tpu.matmul %75, %77, %cst_64 {dimension_numbers = #tpu.dot_dimension_numbers<[1], [0], [0], [1], [0, 0, 1, 1], [], []>} : vector<128x4xf32>, vector<4x4xf32>, vector<128x4xf32> -> vector<128x4xf32>
    %79 = arith.addf %72, %78 : vector<128x4xf32>
    %cst_65 = arith.constant 0.000000e+00 : f32
    %80 = vector.broadcast %cst_65 : f32 to vector<128x4xf32>
    %81 = arith.maximumf %79, %80 : vector<128x4xf32>
    %82 = vector.shape_cast %81 : vector<128x4xf32> to vector<8x16x4xf32>
    %83 = vector.shape_cast %82 : vector<8x16x4xf32> to vector<1x8x16x4xf32>
    %c0_66 = arith.constant 0 : index
    %c0_67 = arith.constant 0 : index
    %c0_68 = arith.constant 0 : index
    %c0_69 = arith.constant 0 : index
    %84 = vector.load %arg5[%c0_66, %c0_67, %c0_68, %c0_69] : memref<1x8x16x4xf32, #tpu.memory_space<vmem>>, vector<1x8x16x4xf32>
    tpu.vector_store %arg5[%c0_66, %c0_67, %c0_68, %c0_69], %83 {strides = array<i32>} : memref<1x8x16x4xf32, #tpu.memory_space<vmem>>, vector<1x8x16x4xf32>,
    return
  }
  func.func @transform_0(%arg0: i32, %arg1: i32) -> (i32, i32, i32, i32) {
    %c0_i32 = arith.constant 0 : i32
    %c0_i32_0 = arith.constant 0 : i32
    %c0_i32_1 = arith.constant 0 : i32
    %c0_i32_2 = arith.constant 0 : i32
    return %arg0, %c0_i32, %c0_i32_0, %c0_i32_1 : i32, i32, i32, i32
  }
  func.func @transform_1(%arg0: i32, %arg1: i32) -> (i32, i32, i32, i32) {
    %c0_i32 = arith.constant 0 : i32
    %c0_i32_0 = arith.constant 0 : i32
    %c0_i32_1 = arith.constant 0 : i32
    %c0_i32_2 = arith.constant 0 : i32
    %c0_i32_3 = arith.constant 0 : i32
    return %c0_i32, %c0_i32_0, %c0_i32_1, %c0_i32_2 : i32, i32, i32, i32
  }
  func.func @transform_2(%arg0: i32, %arg1: i32) -> (i32, i32) {
    %c0_i32 = arith.constant 0 : i32
    %c0_i32_0 = arith.constant 0 : i32
    %c0_i32_1 = arith.constant 0 : i32
    return %c0_i32, %c0_i32_0 : i32, i32
  }
  func.func @transform_3(%arg0: i32, %arg1: i32) -> (i32, i32, i32, i32) {
    %c0_i32 = arith.constant 0 : i32
    %c0_i32_0 = arith.constant 0 : i32
    %c0_i32_1 = arith.constant 0 : i32
    return %arg0, %arg1, %c0_i32, %c0_i32_0 : i32, i32, i32, i32
  }
}

</mosaic_0001>

<llo_original>
// kernel: tpu_custom_call.1
$region0: #{tpu_custom_call.1}
  #allocation0 [shape = 'u32[]', space=smem, size = 0x4, offset = 0x4, fixed_abs, tag = 'smem constant byte address 0x4 - core index']
  #allocation1 [shape = 'u32[144,128]{1,0:T(1,128)}', space=vmem, size = 0x12000, scoped, tag = 'internal scratch']
  #allocation2 [shape = 'f32[3,288,4]{2,1,0:T(8,128)}', space=vmem, size = 0x6c000, scoped, tag = 'scratch operand']
  %s0 = inlined_call_operand.vmem [shape: f32[2,16,16,4], index: 0, kind: input, shape index: {}]
  %s1 = inlined_call_operand.vmem [shape: f32[3,3,4,4], index: 1, kind: input, shape index: {}]
  %s2 = inlined_call_operand.vmem [shape: f32[1,4], index: 2, kind: input, shape index: {}]
  %s3 = inlined_call_operand.vmem [shape: f32[2,16,16,4], index: 3, kind: output, shape index: {}]
  %s4 = sld [smem:[#allocation0]]
  $region49: #{tpu_custom_call.1} parent=0
    _
  %s6 = ssub.s32 1, %s4
  %s7 = scalar_select 0, %s6, %s4
  loop: start=0, step=1, limit=6
  $region2: #{tpu_custom_call.1} parent=0 // loop_pre_header
    _
  $region3: #{tpu_custom_call.1} parent=0 // loop_header
    %s9 = sphi 0, %s13
    %p10 = scmp.ge.s32.totalorder %s9, 6
    %s16 = sphi 0, %s28
    %s17 = sphi 0, %s24
    %s18 = sphi 0, %s16
    %s19 = sphi 0, %s17
    %s20 = sphi 0, %s18
    %s21 = sphi 0, %s19
    %s31 = sphi 0, %s33
    %s34 = sphi 0, %s31
    %s35 = sphi 0, %s34
    %s51 = sphi 0, %s35
    %s55 = sphi 0, %s55
    %s57 = sphi 0, %s55
    %s58 = sphi 0, %s57
    %s72 = sphi 0, %s58
    %s76 = sphi 0, %s76
    %s78 = sphi 0, %s76
    %s79 = sphi 0, %s78
    %s93 = sphi 0, %s79
    %s101 = sphi 0, %s103
    %s104 = sphi 0, %s101
    %s105 = sphi 0, %s104
    %s121 = sphi 0, %s105
  $region4: #{tpu_custom_call.1} parent=0 // loop_header_branch
    %12 = sbr.rel (%p10) target = $region8
  $region5: #{tpu_custom_call.1} parent=0 // loop_body
    %s14 = ssub.s32 %s9, 1
    %s15 = ssub.s32 %s9, 2
    %s22 = sadd.s32 1, %s17
    %p23 = scmp.ge.s32.totalorder %s22, 2
    %s24 = scalar_select %p23, 0, %s22
    %s25 = sadd.s32 1, %s16
    %s26 = scalar_select %p23, %s25, %s16
    %p27 = scmp.ge.s32.totalorder %s26, 2
    %s28 = scalar_select %p27, 0, %s26
    %s29 = ssub.s32 %s16, %s28
    %p30 = scmp.eq.s32.totalorder %s29, 0
    %s32 = sadd.s32 %s31, 1
    %s33 = scalar_select %p30, %s31, %s32
    %p36 = pneg %p30
    %p37 = scmp.eq.s32.totalorder %s9, 3
    %p38 = por %p36, %p37
    %p39 = scmp.ne.s32.totalorder %s31, %s34
    %p40 = scmp.eq.s32.totalorder %s9, 0
    %p41 = por %p39, %p40
    %p42 = scmp.ne.s32.totalorder %s31, %s34
    %p43 = scmp.eq.s32.totalorder %s14, 3
    %p44 = por %p42, %p43
    %p45 = scmp.ne.s32.totalorder %s34, %s35
    %p46 = scmp.eq.s32.totalorder %s14, 0
    %p47 = por %p45, %p46
    %p48 = scmp.ne.s32.totalorder %s34, %s35
    %p49 = scmp.eq.s32.totalorder %s15, 3
    %p50 = por %p48, %p49
    %p52 = scmp.ne.s32.totalorder %s35, %s51
    %p53 = scmp.eq.s32.totalorder %s15, 0
    %p54 = por %p52, %p53
    %s56 = sadd.s32 %s55, 1
    %p59 = scmp.eq.s32.totalorder %s9, 3
    %p60 = scmp.ne.s32.totalorder %s55, %s57
    %p61 = scmp.eq.s32.totalorder %s9, 0
    %p62 = por %p60, %p61
    %p63 = scmp.ne.s32.totalorder %s55, %s57
    %p64 = scmp.eq.s32.totalorder %s14, 3
    %p65 = por %p63, %p64
    %p66 = scmp.ne.s32.totalorder %s57, %s58
    %p67 = scmp.eq.s32.totalorder %s14, 0
    %p68 = por %p66, %p67
    %p69 = scmp.ne.s32.totalorder %s57, %s58
    %p70 = scmp.eq.s32.totalorder %s15, 3
    %p71 = por %p69, %p70
    %p73 = scmp.ne.s32.totalorder %s58, %s72
    %p74 = scmp.eq.s32.totalorder %s15, 0
    %p75 = por %p73, %p74
    %s77 = sadd.s32 %s76, 1
    %p80 = scmp.eq.s32.totalorder %s9, 3
    %p81 = scmp.ne.s32.totalorder %s76, %s78
    %p82 = scmp.eq.s32.totalorder %s9, 0
    %p83 = por %p81, %p82
    %p84 = scmp.ne.s32.totalorder %s76, %s78
    %p85 = scmp.eq.s32.totalorder %s14, 3
    %p86 = por %p84, %p85
    %p87 = scmp.ne.s32.totalorder %s78, %s79
    %p88 = scmp.eq.s32.totalorder %s14, 0
    %p89 = por %p87, %p88
    %p90 = scmp.ne.s32.totalorder %s78, %s79
    %p91 = scmp.eq.s32.totalorder %s15, 3
    %p92 = por %p90, %p91
    %p94 = scmp.ne.s32.totalorder %s79, %s93
    %p95 = scmp.eq.s32.totalorder %s15, 0
    %p96 = por %p94, %p95
    %s97 = ssub.s32 %s16, %s28
    %s98 = ssub.s32 %s17, %s24
    %s99 = sor.u32 %s97, %s98
    %p100 = scmp.eq.s32.totalorder %s99, 0
    %s102 = sadd.s32 %s101, 1
    %s103 = scalar_select %p100, %s101, %s102
    %p106 = pneg %p100
    %p107 = scmp.eq.s32.totalorder %s9, 3
    %p108 = por %p106, %p107
    %p109 = scmp.ne.s32.totalorder %s101, %s104
    %p110 = scmp.eq.s32.totalorder %s9, 0
    %p111 = por %p109, %p110
    %p112 = scmp.ne.s32.totalorder %s101, %s104
    %p113 = scmp.eq.s32.totalorder %s14, 3
    %p114 = por %p112, %p113
    %p115 = scmp.ne.s32.totalorder %s104, %s105
    %p116 = scmp.eq.s32.totalorder %s14, 0
    %p117 = por %p115, %p116
    %p118 = scmp.ne.s32.totalorder %s104, %s105
    %p119 = scmp.eq.s32.totalorder %s15, 3
    %p120 = por %p118, %p119
    %p122 = scmp.ne.s32.totalorder %s105, %s121
    %p123 = scmp.eq.s32.totalorder %s15, 0
    %p124 = por %p122, %p123
    %p125 = scmp.le.s32.totalorder 1, %s9
    %p126 = scmp.lt.s32.totalorder %s9, 5
    %p127 = pnand %p125, %p126
    %p128 = pneg %p127
    // Predicated region
    $region9: #{tpu_custom_call.1} parent=5 // pred_check
      _
    $region10: #{tpu_custom_call.1} parent=5 // pred_check_branch
      %130 = sbr.rel (%p127) target = $region12
    $region11: #{tpu_custom_call.1} parent=5 // pred_region
      %s131 = ssub.s32 %s9, 1
      // Predicated region
      $region13: #{tpu_custom_call.1} parent=11 // pred_check
        %p132 = pneg %p68
      $region14: #{tpu_custom_call.1} parent=11 // pred_check_branch
        %134 = sbr.rel (%p132) target = $region16
      $region15: #{tpu_custom_call.1} parent=11 // pred_region
        _
      $region16: #{tpu_custom_call.1} parent=11 // pred_fallthru
        _
      // Predicated region
      $region17: #{tpu_custom_call.1} parent=11 // pred_check
        %p135 = pneg %p89
      $region18: #{tpu_custom_call.1} parent=11 // pred_check_branch
        %137 = sbr.rel (%p135) target = $region20
      $region19: #{tpu_custom_call.1} parent=11 // pred_region
        _
      $region20: #{tpu_custom_call.1} parent=11 // pred_fallthru
        _
    $region12: #{tpu_custom_call.1} parent=5 // pred_fallthru
      _
    %p138 = scmp.lt.s32.totalorder %s9, 4
    // Predicated region
    $region21: #{tpu_custom_call.1} parent=5 // pred_check
      %p139 = pneg %p138
    $region22: #{tpu_custom_call.1} parent=5 // pred_check_branch
      %141 = sbr.rel (%p139) target = $region24
    $region23: #{tpu_custom_call.1} parent=5 // pred_region
      // Predicated region
      $region25: #{tpu_custom_call.1} parent=23 // pred_check
        %p142 = pneg %p41
      $region26: #{tpu_custom_call.1} parent=23 // pred_check_branch
        %144 = sbr.rel (%p142) target = $region28
      $region27: #{tpu_custom_call.1} parent=23 // pred_region
        %p145 = scmp.lt.s32.totalorder %s16, 1
        %s146 = scalar_select %p145, %s16, 1
        %s147 = smul.addr %s146, 32
        %s148 = smul.addr %s147, 8
        %s149 = scalar_lea.vmem %s0, %s148
      $region28: #{tpu_custom_call.1} parent=23 // pred_fallthru
        _
    $region24: #{tpu_custom_call.1} parent=5 // pred_fallthru
      _
    %p150 = scmp.le.s32.totalorder 1, %s9
    %p151 = scmp.lt.s32.totalorder %s9, 5
    %p152 = pnand %p150, %p151
    %p153 = pneg %p152
    // Predicated region
    $region29: #{tpu_custom_call.1} parent=5 // pred_check
      _
    $region30: #{tpu_custom_call.1} parent=5 // pred_check_branch
      %155 = sbr.rel (%p152) target = $region32
    $region31: #{tpu_custom_call.1} parent=5 // pred_region
      %s156 = ssub.s32 %s9, 1
      %p157 = scmp.lt.s32.totalorder %s18, 1
      %s158 = scalar_select %p157, %s18, 1
      %s159 = smul.addr %s158, 32
      %s160 = smul.addr %s159, 8
      %s161 = scalar_lea.vmem %s0, %s160
      %p162 = pneg %p47
      %p163 = pneg %p44
      %p164 = pneg %p68
      %p165 = pneg %p65
      %p166 = pneg %p89
      %p167 = pneg %p86
      %p168 = pneg %p117
      %p169 = pneg %p114
      %s170 = smul.u32 8, %s19
      %p171 = scmp.lt.s32.totalorder %s18, 1
      %s172 = scalar_select %p171, %s18, 1
      %p173 = scmp.lt.s32.totalorder %s170, 15
      %s174 = scalar_select %p173, %s170, 15
      %s175 = smul.addr %s174, 2
      %s176 = smul.addr %s172, 32
      %s177 = sadd.s32 %s175, %s176
      %s178 = smul.addr %s177, 8
      %s179 = scalar_lea.vmem %s3, %s178
      %p180 = scmp.lt.s32.totalorder %s18, 1
      %s181 = scalar_select %p180, %s18, 1
      %s182 = smul.addr %s181, 32
      %s183 = smul.addr %s182, 8
      %s184 = scalar_lea.vmem %s0, %s183
      %s185 = smul.u32 8, %s19
      %p186 = scmp.lt.s32.totalorder %s18, 1
      %s187 = scalar_select %p186, %s18, 1
      %p188 = scmp.lt.s32.totalorder %s185, 15
      %s189 = scalar_select %p188, %s185, 15
      %s190 = smul.addr %s189, 2
      %s191 = smul.addr %s187, 32
      %s192 = sadd.s32 %s190, %s191
      %s193 = smul.addr %s192, 8
      %s194 = scalar_lea.vmem %s3, %s193
      %s195 = smul.u32 8, %s19
      %p196 = scmp.eq.s32.totalorder %s19, 0
      // Predicated region
      $region33: #{tpu_custom_call.1} parent=31 // pred_check
        %p197 = pneg %p196
      $region34: #{tpu_custom_call.1} parent=31 // pred_check_branch
        %199 = sbr.rel (%p197) target = $region36
      $region35: #{tpu_custom_call.1} parent=31 // pred_region
        %v200 = vld [vmem:[%s184] sm:$0xff]
        %v201 = vld [vmem:[%s184 + $0x8] sm:$0xff]
        %v202 = vld [vmem:[%s184 + $0x10] sm:$0xff]
        %v203 = vld [vmem:[%s184 + $0x18] sm:$0xff]
        %v204 = vld [vmem:[%s184 + $0x20] sm:$0xff]
        %v205 = vld [vmem:[%s184 + $0x28] sm:$0xff]
        %v206 = vld [vmem:[%s184 + $0x30] sm:$0xff]
        %v207 = vld [vmem:[%s184 + $0x38] sm:$0xff]
        %v208 = vld [vmem:[%s184 + $0x40] sm:$0xff]
        %v209 = vld [vmem:[%s184 + $0x48] sm:$0xff]
        %v210 = vld [vmem:[%s184 + $0x50] sm:$0xff]
        %v211 = vld [vmem:[%s184 + $0x58] sm:$0xff]
        %v212 = vld [vmem:[%s184 + $0x60] sm:$0xff]
        %v213 = vld [vmem:[%s184 + $0x68] sm:$0xff]
        %v214 = vld [vmem:[%s184 + $0x70] sm:$0xff]
        %v215 = vld [vmem:[%s184 + $0x78] sm:$0xff]
        %v216 = vld [vmem:[%s184 + $0x80] sm:$0xff]
        %v217 = vld [vmem:[%s184 + $0x88] sm:$0xff]
        %v218 = vld [vmem:[%s184 + $0x90] sm:$0xff]
        %v219 = vld [vmem:[%s184 + $0x98] sm:$0xff]
        %v220 = vld [vmem:[%s184 + $0xa0] sm:$0xff]
        %v221 = vld [vmem:[%s184 + $0xa8] sm:$0xff]
        %v222 = vld [vmem:[%s184 + $0xb0] sm:$0xff]
        %v223 = vld [vmem:[%s184 + $0xb8] sm:$0xff]
        %v224 = vld [vmem:[%s184 + $0xc0] sm:$0xff]
        %v225 = vld [vmem:[%s184 + $0xc8] sm:$0xff]
        %v226 = vld [vmem:[%s184 + $0xd0] sm:$0xff]
        %v227 = vld [vmem:[%s184 + $0xd8] sm:$0xff]
        %v228 = vld [vmem:[%s184 + $0xe0] sm:$0xff]
        %v229 = vld [vmem:[%s184 + $0xe8] sm:$0xff]
        %v230 = vld [vmem:[%s184 + $0xf0] sm:$0xff]
        %v231 = vld [vmem:[%s184 + $0xf8] sm:$0xff]
        %vm264 = vcmask 1040384
        %v265 = vrot.slane %v200, 7
        %v266 = vrot.slane %v201, 7
        %v267 = vsel %vm264, %v265, %v266
        %v268 = vrot.slane %v202, 7
        %v269 = vrot.slane %v203, 7
        %v270 = vsel %vm264, %v268, %v269
        %v271 = vrot.slane %v204, 7
        %v272 = vrot.slane %v205, 7
        %v273 = vsel %vm264, %v271, %v272
        %v274 = vrot.slane %v206, 7
        %v275 = vrot.slane %v207, 7
        %v276 = vsel %vm264, %v274, %v275
        %v277 = vrot.slane %v208, 7
        %v278 = vrot.slane %v209, 7
        %v279 = vsel %vm264, %v277, %v278
        %v280 = vrot.slane %v210, 7
        %v281 = vrot.slane %v211, 7
        %v282 = vsel %vm264, %v280, %v281
        %v283 = vrot.slane %v212, 7
        %v284 = vrot.slane %v213, 7
        %v285 = vsel %vm264, %v283, %v284
        %v286 = vrot.slane %v214, 7
        %v287 = vrot.slane %v215, 7
        %v288 = vsel %vm264, %v286, %v287
        %v289 = vrot.slane %v216, 7
        %v290 = vrot.slane %v217, 7
        %v291 = vsel %vm264, %v289, %v290
        %v292 = vrot.slane %v218, 7
        %v293 = vrot.slane %v219, 7
        %v294 = vsel %vm264, %v292, %v293
        %v295 = vrot.slane %v220, 7
        %v296 = vrot.slane %v221, 7
        %v297 = vsel %vm264, %v295, %v296
        %v298 = vrot.slane %v222, 7
        %v299 = vrot.slane %v223, 7
        %v300 = vsel %vm264, %v298, %v299
        %v301 = vrot.slane %v224, 7
        %v302 = vrot.slane %v225, 7
        %v303 = vsel %vm264, %v301, %v302
        %v304 = vrot.slane %v226, 7
        %v305 = vrot.slane %v227, 7
        %v306 = vsel %vm264, %v304, %v305
        %v307 = vrot.slane %v228, 7
        %v308 = vrot.slane %v229, 7
        %v309 = vsel %vm264, %v307, %v308
        %v310 = vrot.slane %v230, 7
        %v311 = vrot.slane %v231, 7
        %v312 = vsel %vm264, %v310, %v311
        %v345 = vsel %vm264, 0.0, %v265
        %v346 = vsel %vm264, 0.0, %v268
        %v347 = vsel %vm264, 0.0, %v271
        %v348 = vsel %vm264, 0.0, %v274
        %v349 = vsel %vm264, 0.0, %v277
        %v350 = vsel %vm264, 0.0, %v280
        %v351 = vsel %vm264, 0.0, %v283
        %v352 = vsel %vm264, 0.0, %v286
        %v353 = vsel %vm264, 0.0, %v289
        %v354 = vsel %vm264, 0.0, %v292
        %v355 = vsel %vm264, 0.0, %v295
        %v356 = vsel %vm264, 0.0, %v298
        %v357 = vsel %vm264, 0.0, %v301
        %v358 = vsel %vm264, 0.0, %v304
        %v359 = vsel %vm264, 0.0, %v307
        %v360 = vsel %vm264, 0.0, %v310
        %vm361 = vcmask 31744
        %362 = vst.msk [vmem:[#allocation2] sm:$0xff] %vm361, 0.0
        %363 = vst.msk [vmem:[#allocation2 + $0x8] sm:$0xff] %vm361, 0.0
        %364 = vst.msk [vmem:[#allocation2 + $0x10] sm:$0xff] %vm361, %v345
        %365 = vst.msk [vmem:[#allocation2 + $0x18] sm:$0xff] %vm361, %v267
        %366 = vst.msk [vmem:[#allocation2 + $0x20] sm:$0xff] %vm361, %v346
        %367 = vst.msk [vmem:[#allocation2 + $0x28] sm:$0xff] %vm361, %v270
        %368 = vst.msk [vmem:[#allocation2 + $0x30] sm:$0xff] %vm361, %v347
        %369 = vst.msk [vmem:[#allocation2 + $0x38] sm:$0xff] %vm361, %v273
        %370 = vst.msk [vmem:[#allocation2 + $0x40] sm:$0xff] %vm361, %v348
        %371 = vst.msk [vmem:[#allocation2 + $0x48] sm:$0xff] %vm361, %v276
        %372 = vst.msk [vmem:[#allocation2 + $0x50] sm:$0xff] %vm361, %v349
        %373 = vst.msk [vmem:[#allocation2 + $0x58] sm:$0xff] %vm361, %v279
        %374 = vst.msk [vmem:[#allocation2 + $0x60] sm:$0xff] %vm361, %v350
        %375 = vst.msk [vmem:[#allocation2 + $0x68] sm:$0xff] %vm361, %v282
        %376 = vst.msk [vmem:[#allocation2 + $0x70] sm:$0xff] %vm361, %v351
        %377 = vst.msk [vmem:[#allocation2 + $0x78] sm:$0xff] %vm361, %v285
        %378 = vst.msk [vmem:[#allocation2 + $0x80] sm:$0xff] %vm361, %v352
        %379 = vst.msk [vmem:[#allocation2 + $0x88] sm:$0xff] %vm361, %v288
        %380 = vst.msk [vmem:[#allocation2 + $0x90] sm:$0xff] %vm361, %v353
        %381 = vst.msk [vmem:[#allocation2 + $0x98] sm:$0xff] %vm361, %v291
        %382 = vst.msk [vmem:[#allocation2 + $0xa0] sm:$0xff] %vm361, %v354
        %383 = vst.msk [vmem:[#allocation2 + $0xa8] sm:$0xff] %vm361, %v294
        %384 = vst.msk [vmem:[#allocation2 + $0xb0] sm:$0xff] %vm361, %v355
        %385 = vst.msk [vmem:[#allocation2 + $0xb8] sm:$0xff] %vm361, %v297
        %386 = vst.msk [vmem:[#allocation2 + $0xc0] sm:$0xff] %vm361, %v356
        %387 = vst.msk [vmem:[#allocation2 + $0xc8] sm:$0xff] %vm361, %v300
        %388 = vst.msk [vmem:[#allocation2 + $0xd0] sm:$0xff] %vm361, %v357
        %389 = vst.msk [vmem:[#allocation2 + $0xd8] sm:$0xff] %vm361, %v303
        %390 = vst.msk [vmem:[#allocation2 + $0xe0] sm:$0xff] %vm361, %v358
        %391 = vst.msk [vmem:[#allocation2 + $0xe8] sm:$0xff] %vm361, %v306
        %392 = vst.msk [vmem:[#allocation2 + $0xf0] sm:$0xff] %vm361, %v359
        %393 = vst.msk [vmem:[#allocation2 + $0xf8] sm:$0xff] %vm361, %v309
        %394 = vst.msk [vmem:[#allocation2 + $0x100] sm:$0xff] %vm361, %v360
        %395 = vst.msk [vmem:[#allocation2 + $0x108] sm:$0xff] %vm361, %v312
        %396 = vst.msk [vmem:[#allocation2 + $0x110] sm:$0xff] %vm361, 0.0
        %397 = vst.msk [vmem:[#allocation2 + $0x118] sm:$0xff] %vm361, 0.0
        %s398 = scalar_lea.vmem [#allocation2], 288
        %399 = vst.msk [vmem:[%s398] sm:$0xff] %vm361, 0.0
        %400 = vst.msk [vmem:[%s398 + $0x8] sm:$0xff] %vm361, 0.0
        %401 = vst.msk [vmem:[%s398 + $0x10] sm:$0xff] %vm361, %v200
        %402 = vst.msk [vmem:[%s398 + $0x18] sm:$0xff] %vm361, %v201
        %403 = vst.msk [vmem:[%s398 + $0x20] sm:$0xff] %vm361, %v202
        %404 = vst.msk [vmem:[%s398 + $0x28] sm:$0xff] %vm361, %v203
        %405 = vst.msk [vmem:[%s398 + $0x30] sm:$0xff] %vm361, %v204
        %406 = vst.msk [vmem:[%s398 + $0x38] sm:$0xff] %vm361, %v205
        %407 = vst.msk [vmem:[%s398 + $0x40] sm:$0xff] %vm361, %v206
        %408 = vst.msk [vmem:[%s398 + $0x48] sm:$0xff] %vm361, %v207
        %409 = vst.msk [vmem:[%s398 + $0x50] sm:$0xff] %vm361, %v208
        %410 = vst.msk [vmem:[%s398 + $0x58] sm:$0xff] %vm361, %v209
        %411 = vst.msk [vmem:[%s398 + $0x60] sm:$0xff] %vm361, %v210
        %412 = vst.msk [vmem:[%s398 + $0x68] sm:$0xff] %vm361, %v211
        %413 = vst.msk [vmem:[%s398 + $0x70] sm:$0xff] %vm361, %v212
        %414 = vst.msk [vmem:[%s398 + $0x78] sm:$0xff] %vm361, %v213
        %415 = vst.msk [vmem:[%s398 + $0x80] sm:$0xff] %vm361, %v214
        %416 = vst.msk [vmem:[%s398 + $0x88] sm:$0xff] %vm361, %v215
        %417 = vst.msk [vmem:[%s398 + $0x90] sm:$0xff] %vm361, %v216
        %418 = vst.msk [vmem:[%s398 + $0x98] sm:$0xff] %vm361, %v217
        %419 = vst.msk [vmem:[%s398 + $0xa0] sm:$0xff] %vm361, %v218
        %420 = vst.msk [vmem:[%s398 + $0xa8] sm:$0xff] %vm361, %v219
        %421 = vst.msk [vmem:[%s398 + $0xb0] sm:$0xff] %vm361, %v220
        %422 = vst.msk [vmem:[%s398 + $0xb8] sm:$0xff] %vm361, %v221
        %423 = vst.msk [vmem:[%s398 + $0xc0] sm:$0xff] %vm361, %v222
        %424 = vst.msk [vmem:[%s398 + $0xc8] sm:$0xff] %vm361, %v223
        %425 = vst.msk [vmem:[%s398 + $0xd0] sm:$0xff] %vm361, %v224
        %426 = vst.msk [vmem:[%s398 + $0xd8] sm:$0xff] %vm361, %v225
        %427 = vst.msk [vmem:[%s398 + $0xe0] sm:$0xff] %vm361, %v226
        %428 = vst.msk [vmem:[%s398 + $0xe8] sm:$0xff] %vm361, %v227
        %429 = vst.msk [vmem:[%s398 + $0xf0] sm:$0xff] %vm361, %v228
        %430 = vst.msk [vmem:[%s398 + $0xf8] sm:$0xff] %vm361, %v229
        %431 = vst.msk [vmem:[%s398 + $0x100] sm:$0xff] %vm361, %v230
        %432 = vst.msk [vmem:[%s398 + $0x108] sm:$0xff] %vm361, %v231
        %433 = vst.msk [vmem:[%s398 + $0x110] sm:$0xff] %vm361, 0.0
        %434 = vst.msk [vmem:[%s398 + $0x118] sm:$0xff] %vm361, 0.0
        %vm435 = vcmask 1046528
        %v436 = vrot.slane %v200, 1
        %v437 = vrot.slane %v201, 1
        %v438 = vsel %vm435, %v436, %v437
        %v439 = vrot.slane %v202, 1
        %v440 = vrot.slane %v203, 1
        %v441 = vsel %vm435, %v439, %v440
        %v442 = vrot.slane %v204, 1
        %v443 = vrot.slane %v205, 1
        %v444 = vsel %vm435, %v442, %v443
        %v445 = vrot.slane %v206, 1
        %v446 = vrot.slane %v207, 1
        %v447 = vsel %vm435, %v445, %v446
        %v448 = vrot.slane %v208, 1
        %v449 = vrot.slane %v209, 1
        %v450 = vsel %vm435, %v448, %v449
        %v451 = vrot.slane %v210, 1
        %v452 = vrot.slane %v211, 1
        %v453 = vsel %vm435, %v451, %v452
        %v454 = vrot.slane %v212, 1
        %v455 = vrot.slane %v213, 1
        %v456 = vsel %vm435, %v454, %v455
        %v457 = vrot.slane %v214, 1
        %v458 = vrot.slane %v215, 1
        %v459 = vsel %vm435, %v457, %v458
        %v460 = vrot.slane %v216, 1
        %v461 = vrot.slane %v217, 1
        %v462 = vsel %vm435, %v460, %v461
        %v463 = vrot.slane %v218, 1
        %v464 = vrot.slane %v219, 1
        %v465 = vsel %vm435, %v463, %v464
        %v466 = vrot.slane %v220, 1
        %v467 = vrot.slane %v221, 1
        %v468 = vsel %vm435, %v466, %v467
        %v469 = vrot.slane %v222, 1
        %v470 = vrot.slane %v223, 1
        %v471 = vsel %vm435, %v469, %v470
        %v472 = vrot.slane %v224, 1
        %v473 = vrot.slane %v225, 1
        %v474 = vsel %vm435, %v472, %v473
        %v475 = vrot.slane %v226, 1
        %v476 = vrot.slane %v227, 1
        %v477 = vsel %vm435, %v475, %v476
        %v478 = vrot.slane %v228, 1
        %v479 = vrot.slane %v229, 1
        %v480 = vsel %vm435, %v478, %v479
        %v481 = vrot.slane %v230, 1
        %v482 = vrot.slane %v231, 1
        %v483 = vsel %vm435, %v481, %v482
        %v516 = vsel %vm435, %v437, 0.0
        %v517 = vsel %vm435, %v440, 0.0
        %v518 = vsel %vm435, %v443, 0.0
        %v519 = vsel %vm435, %v446, 0.0
        %v520 = vsel %vm435, %v449, 0.0
        %v521 = vsel %vm435, %v452, 0.0
        %v522 = vsel %vm435, %v455, 0.0
        %v523 = vsel %vm435, %v458, 0.0
        %v524 = vsel %vm435, %v461, 0.0
        %v525 = vsel %vm435, %v464, 0.0
        %v526 = vsel %vm435, %v467, 0.0
        %v527 = vsel %vm435, %v470, 0.0
        %v528 = vsel %vm435, %v473, 0.0
        %v529 = vsel %vm435, %v476, 0.0
        %v530 = vsel %vm435, %v479, 0.0
        %v531 = vsel %vm435, %v482, 0.0
        %s532 = scalar_lea.vmem [#allocation2], 576
        %533 = vst.msk [vmem:[%s532] sm:$0xff] %vm361, 0.0
        %534 = vst.msk [vmem:[%s532 + $0x8] sm:$0xff] %vm361, 0.0
        %535 = vst.msk [vmem:[%s532 + $0x10] sm:$0xff] %vm361, %v438
        %536 = vst.msk [vmem:[%s532 + $0x18] sm:$0xff] %vm361, %v516
        %537 = vst.msk [vmem:[%s532 + $0x20] sm:$0xff] %vm361, %v441
        %538 = vst.msk [vmem:[%s532 + $0x28] sm:$0xff] %vm361, %v517
        %539 = vst.msk [vmem:[%s532 + $0x30] sm:$0xff] %vm361, %v444
        %540 = vst.msk [vmem:[%s532 + $0x38] sm:$0xff] %vm361, %v518
        %541 = vst.msk [vmem:[%s532 + $0x40] sm:$0xff] %vm361, %v447
        %542 = vst.msk [vmem:[%s532 + $0x48] sm:$0xff] %vm361, %v519
        %543 = vst.msk [vmem:[%s532 + $0x50] sm:$0xff] %vm361, %v450
        %544 = vst.msk [vmem:[%s532 + $0x58] sm:$0xff] %vm361, %v520
        %545 = vst.msk [vmem:[%s532 + $0x60] sm:$0xff] %vm361, %v453
        %546 = vst.msk [vmem:[%s532 + $0x68] sm:$0xff] %vm361, %v521
        %547 = vst.msk [vmem:[%s532 + $0x70] sm:$0xff] %vm361, %v456
        %548 = vst.msk [vmem:[%s532 + $0x78] sm:$0xff] %vm361, %v522
        %549 = vst.msk [vmem:[%s532 + $0x80] sm:$0xff] %vm361, %v459
        %550 = vst.msk [vmem:[%s532 + $0x88] sm:$0xff] %vm361, %v523
        %551 = vst.msk [vmem:[%s532 + $0x90] sm:$0xff] %vm361, %v462
        %552 = vst.msk [vmem:[%s532 + $0x98] sm:$0xff] %vm361, %v524
        %553 = vst.msk [vmem:[%s532 + $0xa0] sm:$0xff] %vm361, %v465
        %554 = vst.msk [vmem:[%s532 + $0xa8] sm:$0xff] %vm361, %v525
        %555 = vst.msk [vmem:[%s532 + $0xb0] sm:$0xff] %vm361, %v468
        %556 = vst.msk [vmem:[%s532 + $0xb8] sm:$0xff] %vm361, %v526
        %557 = vst.msk [vmem:[%s532 + $0xc0] sm:$0xff] %vm361, %v471
        %558 = vst.msk [vmem:[%s532 + $0xc8] sm:$0xff] %vm361, %v527
        %559 = vst.msk [vmem:[%s532 + $0xd0] sm:$0xff] %vm361, %v474
        %560 = vst.msk [vmem:[%s532 + $0xd8] sm:$0xff] %vm361, %v528
        %561 = vst.msk [vmem:[%s532 + $0xe0] sm:$0xff] %vm361, %v477
        %562 = vst.msk [vmem:[%s532 + $0xe8] sm:$0xff] %vm361, %v529
        %563 = vst.msk [vmem:[%s532 + $0xf0] sm:$0xff] %vm361, %v480
        %564 = vst.msk [vmem:[%s532 + $0xf8] sm:$0xff] %vm361, %v530
        %565 = vst.msk [vmem:[%s532 + $0x100] sm:$0xff] %vm361, %v483
        %566 = vst.msk [vmem:[%s532 + $0x108] sm:$0xff] %vm361, %v531
        %567 = vst.msk [vmem:[%s532 + $0x110] sm:$0xff] %vm361, 0.0
        %568 = vst.msk [vmem:[%s532 + $0x118] sm:$0xff] %vm361, 0.0
      $region36: #{tpu_custom_call.1} parent=31 // pred_fallthru
        _
      %s569 = smul.u32 %s19, 8
      %v570 = vld [vmem:[%s2] sm:$0x1]
      %v572 = vlaneseq
      %v573 = vshrl.u32 %v572, 7
      %v574 = vsub.s32 0, %v573
      %v575 = vrot.slane %v570, %v574
      %s577 = smul.u32 %s569, 16
      %s578 = scalar_lea.vmem [#allocation2], %s577
      %v579 = vld [vmem:[%s578] sm:$0xff]
      %v580 = vld [vmem:[%s578 + $0x8] sm:$0xff]
      %v581 = vld [vmem:[%s578 + $0x10] sm:$0xff]
      %v582 = vld [vmem:[%s578 + $0x18] sm:$0xff]
      %v583 = vld [vmem:[%s578 + $0x20] sm:$0xff]
      %v584 = vld [vmem:[%s578 + $0x28] sm:$0xff]
      %v585 = vld [vmem:[%s578 + $0x30] sm:$0xff]
      %v586 = vld [vmem:[%s578 + $0x38] sm:$0xff]
      %v587 = vld [vmem:[%s578 + $0x40] sm:$0xff]
      %v588 = vld [vmem:[%s578 + $0x48] sm:$0xff]
      %v589 = vld [vmem:[%s578 + $0x50] sm:$0xff]
      %v590 = vld [vmem:[%s578 + $0x58] sm:$0xff]
      %v591 = vld [vmem:[%s578 + $0x60] sm:$0xff]
      %v592 = vld [vmem:[%s578 + $0x68] sm:$0xff]
      %v593 = vld [vmem:[%s578 + $0x70] sm:$0xff]
      %v594 = vld [vmem:[%s578 + $0x78] sm:$0xff]
      %v595 = vld [vmem:[%s1] sm:$0xf]
      %vm596 = vcmask 31744
      %v598 = vsel %vm596, %v579, 0
      %v601 = vsel %vm596, %v580, 0
      %v604 = vsel %vm596, %v581, 0
      %v607 = vsel %vm596, %v582, 0
      %v610 = vsel %vm596, %v583, 0
      %v613 = vsel %vm596, %v584, 0
      %v616 = vsel %vm596, %v585, 0
      %v619 = vsel %vm596, %v586, 0
      %v622 = vsel %vm596, %v587, 0
      %v625 = vsel %vm596, %v588, 0
      %v628 = vsel %vm596, %v589, 0
      %v631 = vsel %vm596, %v590, 0
      %v634 = vsel %vm596, %v591, 0
      %v637 = vsel %vm596, %v592, 0
      %v640 = vsel %vm596, %v593, 0
      %v643 = vsel %vm596, %v594, 0
      %vm645 = vcmask 1043456
      %v647 = vsel %vm645, %v595, 0
      %649 = vmatprep.subr.mxu0 0.0
      %650 = vmatpush1.msra.mxu0 0.0
      %651 = vmatprep.subr.mxu0 0.0
      %652 = vmatpush1.msra.mxu0 0.0
      %653 = vmatprep.subr.mxu0 0.0
      %654 = vmatpush1.msra.mxu0 0.0
      %655 = vmatprep.subr.mxu0 0.0
      %656 = vmatpush1.msra.mxu0 0.0
      %657 = vmatprep.subr.mxu0 0.0
      %658 = vmatpush1.msra.mxu0 0.0
      %659 = vmatprep.subr.mxu0 0.0
      %660 = vmatpush1.msra.mxu0 0.0
      %661 = vmatprep.subr.mxu0 0.0
      %662 = vmatpush1.msra.mxu0 0.0
      %663 = vmatprep.subr.mxu0 0.0
      %664 = vmatpush1.msra.mxu0 0.0
      %665 = vmatprep.subr.mxu0 0.0
      %666 = vmatpush1.msra.mxu0 0.0
      %667 = vmatprep.subr.mxu0 0.0
      %668 = vmatpush1.msra.mxu0 0.0
      %669 = vmatprep.subr.mxu0 0.0
      %670 = vmatpush1.msra.mxu0 0.0
      %671 = vmatprep.subr.mxu0 0.0
      %672 = vmatpush1.msra.mxu0 0.0
      %673 = vmatprep.subr.mxu0 0.0
      %674 = vmatpush1.msra.mxu0 0.0
      %675 = vmatprep.subr.mxu0 0.0
      %676 = vmatpush1.msra.mxu0 0.0
      %677 = vmatprep.subr.mxu0 0.0
      %678 = vmatpush1.msra.mxu0 0.0
      %679 = vmatprep.subr.mxu0 0.0
      %680 = vmatpush1.msra.mxu0 %v647
      %681 = vmatprep.subr.mxu0 0.0
      %682 = vmatpush2.msra.mxu0 0.0
      %683 = vmatprep.subr.mxu0 0.0
      %684 = vmatpush2.msra.mxu0 0.0
      %685 = vmatprep.subr.mxu0 0.0
      %686 = vmatpush2.msra.mxu0 0.0
      %687 = vmatprep.subr.mxu0 0.0
      %688 = vmatpush2.msra.mxu0 0.0
      %689 = vmatprep.subr.mxu0 0.0
      %690 = vmatpush2.msra.mxu0 0.0
      %691 = vmatprep.subr.mxu0 0.0
      %692 = vmatpush2.msra.mxu0 0.0
      %693 = vmatprep.subr.mxu0 0.0
      %694 = vmatpush2.msra.mxu0 0.0
      %695 = vmatprep.subr.mxu0 0.0
      %696 = vmatpush2.msra.mxu0 0.0
      %697 = vmatprep.subr.mxu0 0.0
      %698 = vmatpush2.msra.mxu0 0.0
      %699 = vmatprep.subr.mxu0 0.0
      %700 = vmatpush2.msra.mxu0 0.0
      %701 = vmatprep.subr.mxu0 0.0
      %702 = vmatpush2.msra.mxu0 0.0
      %703 = vmatprep.subr.mxu0 0.0
      %704 = vmatpush2.msra.mxu0 0.0
      %705 = vmatprep.subr.mxu0 0.0
      %706 = vmatpush2.msra.mxu0 0.0
      %707 = vmatprep.subr.mxu0 0.0
      %708 = vmatpush2.msra.mxu0 0.0
      %709 = vmatprep.subr.mxu0 0.0
      %710 = vmatpush2.msra.mxu0 0.0
      %711 = vmatprep.subr.mxu0 0.0
      %712 = vmatpush2.msra.mxu0 0.0
      %713 = vmatprep.mubr.f32.mxu0 0.0
      %714 = vmatmul.mubr.f32.gmra.mxu0 %v598
      %v715 = vpop.f32.mrf.mxu0
      %v716 = vadd.f32 0.0, %v715
      %v717 = vpop.f32.mrf.mxu0
      %718 = vmatprep.mubr.f32.mxu0 0.0
      %719 = vmatmul.mubr.f32.gmra.mxu0 %v601
      %v720 = vpop.f32.mrf.mxu0
      %v721 = vadd.f32 0.0, %v720
      %v722 = vpop.f32.mrf.mxu0
      %723 = vmatprep.mubr.f32.mxu0 0.0
      %724 = vmatmul.mubr.f32.gmra.mxu0 %v604
      %v725 = vpop.f32.mrf.mxu0
      %v726 = vadd.f32 0.0, %v725
      %v727 = vpop.f32.mrf.mxu0
      %728 = vmatprep.mubr.f32.mxu0 0.0
      %729 = vmatmul.mubr.f32.gmra.mxu0 %v607
      %v730 = vpop.f32.mrf.mxu0
      %v731 = vadd.f32 0.0, %v730
      %v732 = vpop.f32.mrf.mxu0
      %733 = vmatprep.mubr.f32.mxu0 0.0
      %734 = vmatmul.mubr.f32.gmra.mxu0 %v610
      %v735 = vpop.f32.mrf.mxu0
      %v736 = vadd.f32 0.0, %v735
      %v737 = vpop.f32.mrf.mxu0
      %738 = vmatprep.mubr.f32.mxu0 0.0
      %739 = vmatmul.mubr.f32.gmra.mxu0 %v613
      %v740 = vpop.f32.mrf.mxu0
      %v741 = vadd.f32 0.0, %v740
      %v742 = vpop.f32.mrf.mxu0
      %743 = vmatprep.mubr.f32.mxu0 0.0
      %744 = vmatmul.mubr.f32.gmra.mxu0 %v616
      %v745 = vpop.f32.mrf.mxu0
      %v746 = vadd.f32 0.0, %v745
      %v747 = vpop.f32.mrf.mxu0
      %748 = vmatprep.mubr.f32.mxu0 0.0
      %749 = vmatmul.mubr.f32.gmra.mxu0 %v619
      %v750 = vpop.f32.mrf.mxu0
      %v751 = vadd.f32 0.0, %v750
      %v752 = vpop.f32.mrf.mxu0
      %753 = vmatprep.mubr.f32.mxu0 0.0
      %754 = vmatmul.mubr.f32.gmra.mxu0 %v622
      %v755 = vpop.f32.mrf.mxu0
      %v756 = vadd.f32 0.0, %v755
      %v757 = vpop.f32.mrf.mxu0
      %758 = vmatprep.mubr.f32.mxu0 0.0
      %759 = vmatmul.mubr.f32.gmra.mxu0 %v625
      %v760 = vpop.f32.mrf.mxu0
      %v761 = vadd.f32 0.0, %v760
      %v762 = vpop.f32.mrf.mxu0
      %763 = vmatprep.mubr.f32.mxu0 0.0
      %764 = vmatmul.mubr.f32.gmra.mxu0 %v628
      %v765 = vpop.f32.mrf.mxu0
      %v766 = vadd.f32 0.0, %v765
      %v767 = vpop.f32.mrf.mxu0
      %768 = vmatprep.mubr.f32.mxu0 0.0
      %769 = vmatmul.mubr.f32.gmra.mxu0 %v631
      %v770 = vpop.f32.mrf.mxu0
      %v771 = vadd.f32 0.0, %v770
      %v772 = vpop.f32.mrf.mxu0
      %773 = vmatprep.mubr.f32.mxu0 0.0
      %774 = vmatmul.mubr.f32.gmra.mxu0 %v634
      %v775 = vpop.f32.mrf.mxu0
      %v776 = vadd.f32 0.0, %v775
      %v777 = vpop.f32.mrf.mxu0
      %778 = vmatprep.mubr.f32.mxu0 0.0
      %779 = vmatmul.mubr.f32.gmra.mxu0 %v637
      %v780 = vpop.f32.mrf.mxu0
      %v781 = vadd.f32 0.0, %v780
      %v782 = vpop.f32.mrf.mxu0
      %783 = vmatprep.mubr.f32.mxu0 0.0
      %784 = vmatmul.mubr.f32.gmra.mxu0 %v640
      %v785 = vpop.f32.mrf.mxu0
      %v786 = vadd.f32 0.0, %v785
      %v787 = vpop.f32.mrf.mxu0
      %788 = vmatprep.mubr.f32.mxu0 0.0
      %789 = vmatmul.mubr.f32.gmra.mxu0 %v643
      %v790 = vpop.f32.mrf.mxu0
      %v791 = vadd.f32 0.0, %v790
      %v792 = vpop.f32.mrf.mxu0
      %793 = vdwg.mxu0
      %v794 = vadd.f32 %v575, %v716
      %v795 = vadd.f32 %v575, %v721
      %v796 = vadd.f32 %v575, %v726
      %v797 = vadd.f32 %v575, %v731
      %v798 = vadd.f32 %v575, %v736
      %v799 = vadd.f32 %v575, %v741
      %v800 = vadd.f32 %v575, %v746
      %v801 = vadd.f32 %v575, %v751
      %v802 = vadd.f32 %v575, %v756
      %v803 = vadd.f32 %v575, %v761
      %v804 = vadd.f32 %v575, %v766
      %v805 = vadd.f32 %v575, %v771
      %v806 = vadd.f32 %v575, %v776
      %v807 = vadd.f32 %v575, %v781
      %v808 = vadd.f32 %v575, %v786
      %v809 = vadd.f32 %v575, %v791
      %s810 = sadd.s32 %s577, 288
      %s811 = scalar_lea.vmem [#allocation2], %s810
      %v812 = vld [vmem:[%s811] sm:$0xff]
      %v813 = vld [vmem:[%s811 + $0x8] sm:$0xff]
      %v814 = vld [vmem:[%s811 + $0x10] sm:$0xff]
      %v815 = vld [vmem:[%s811 + $0x18] sm:$0xff]
      %v816 = vld [vmem:[%s811 + $0x20] sm:$0xff]
      %v817 = vld [vmem:[%s811 + $0x28] sm:$0xff]
      %v818 = vld [vmem:[%s811 + $0x30] sm:$0xff]
      %v819 = vld [vmem:[%s811 + $0x38] sm:$0xff]
      %v820 = vld [vmem:[%s811 + $0x40] sm:$0xff]
      %v821 = vld [vmem:[%s811 + $0x48] sm:$0xff]
      %v822 = vld [vmem:[%s811 + $0x50] sm:$0xff]
      %v823 = vld [vmem:[%s811 + $0x58] sm:$0xff]
      %v824 = vld [vmem:[%s811 + $0x60] sm:$0xff]
      %v825 = vld [vmem:[%s811 + $0x68] sm:$0xff]
      %v826 = vld [vmem:[%s811 + $0x70] sm:$0xff]
      %v827 = vld [vmem:[%s811 + $0x78] sm:$0xff]
      %s828 = scalar_lea.vmem %s1, 4
      %v829 = vld [vmem:[%s828] sm:$0xf]
      %v831 = vsel %vm596, %v812, 0
      %v834 = vsel %vm596, %v813, 0
      %v837 = vsel %vm596, %v814, 0
      %v840 = vsel %vm596, %v815, 0
      %v843 = vsel %vm596, %v816, 0
      %v846 = vsel %vm596, %v817, 0
      %v849 = vsel %vm596, %v818, 0
      %v852 = vsel %vm596, %v819, 0
      %v855 = vsel %vm596, %v820, 0
      %v858 = vsel %vm596, %v821, 0
      %v861 = vsel %vm596, %v822, 0
      %v864 = vsel %vm596, %v823, 0
      %v867 = vsel %vm596, %v824, 0
      %v870 = vsel %vm596, %v825, 0
      %v873 = vsel %vm596, %v826, 0
      %v876 = vsel %vm596, %v827, 0
      %v879 = vsel %vm645, %v829, 0
      %881 = vmatprep.subr.mxu0 0.0
      %882 = vmatpush1.msra.mxu0 0.0
      %883 = vmatprep.subr.mxu0 0.0
      %884 = vmatpush1.msra.mxu0 0.0
      %885 = vmatprep.subr.mxu0 0.0
      %886 = vmatpush1.msra.mxu0 0.0
      %887 = vmatprep.subr.mxu0 0.0
      %888 = vmatpush1.msra.mxu0 0.0
      %889 = vmatprep.subr.mxu0 0.0
      %890 = vmatpush1.msra.mxu0 0.0
      %891 = vmatprep.subr.mxu0 0.0
      %892 = vmatpush1.msra.mxu0 0.0
      %893 = vmatprep.subr.mxu0 0.0
      %894 = vmatpush1.msra.mxu0 0.0
      %895 = vmatprep.subr.mxu0 0.0
      %896 = vmatpush1.msra.mxu0 0.0
      %897 = vmatprep.subr.mxu0 0.0
      %898 = vmatpush1.msra.mxu0 0.0
      %899 = vmatprep.subr.mxu0 0.0
      %900 = vmatpush1.msra.mxu0 0.0
      %901 = vmatprep.subr.mxu0 0.0
      %902 = vmatpush1.msra.mxu0 0.0
      %903 = vmatprep.subr.mxu0 0.0
      %904 = vmatpush1.msra.mxu0 0.0
      %905 = vmatprep.subr.mxu0 0.0
      %906 = vmatpush1.msra.mxu0 0.0
      %907 = vmatprep.subr.mxu0 0.0
      %908 = vmatpush1.msra.mxu0 0.0
      %909 = vmatprep.subr.mxu0 0.0
      %910 = vmatpush1.msra.mxu0 0.0
      %911 = vmatprep.subr.mxu0 0.0
      %912 = vmatpush1.msra.mxu0 %v879
      %913 = vmatprep.subr.mxu0 0.0
      %914 = vmatpush2.msra.mxu0 0.0
      %915 = vmatprep.subr.mxu0 0.0
      %916 = vmatpush2.msra.mxu0 0.0
      %917 = vmatprep.subr.mxu0 0.0
      %918 = vmatpush2.msra.mxu0 0.0
      %919 = vmatprep.subr.mxu0 0.0
      %920 = vmatpush2.msra.mxu0 0.0
      %921 = vmatprep.subr.mxu0 0.0
      %922 = vmatpush2.msra.mxu0 0.0
      %923 = vmatprep.subr.mxu0 0.0
      %924 = vmatpush2.msra.mxu0 0.0
      %925 = vmatprep.subr.mxu0 0.0
      %926 = vmatpush2.msra.mxu0 0.0
      %927 = vmatprep.subr.mxu0 0.0
      %928 = vmatpush2.msra.mxu0 0.0
      %929 = vmatprep.subr.mxu0 0.0
      %930 = vmatpush2.msra.mxu0 0.0
      %931 = vmatprep.subr.mxu0 0.0
      %932 = vmatpush2.msra.mxu0 0.0
      %933 = vmatprep.subr.mxu0 0.0
      %934 = vmatpush2.msra.mxu0 0.0
      %935 = vmatprep.subr.mxu0 0.0
      %936 = vmatpush2.msra.mxu0 0.0
      %937 = vmatprep.subr.mxu0 0.0
      %938 = vmatpush2.msra.mxu0 0.0
      %939 = vmatprep.subr.mxu0 0.0
      %940 = vmatpush2.msra.mxu0 0.0
      %941 = vmatprep.subr.mxu0 0.0
      %942 = vmatpush2.msra.mxu0 0.0
      %943 = vmatprep.subr.mxu0 0.0
      %944 = vmatpush2.msra.mxu0 0.0
      %945 = vmatprep.mubr.f32.mxu0 0.0
      %946 = vmatmul.mubr.f32.gmra.mxu0 %v831
      %v947 = vpop.f32.mrf.mxu0
      %v948 = vadd.f32 0.0, %v947
      %v949 = vpop.f32.mrf.mxu0
      %950 = vmatprep.mubr.f32.mxu0 0.0
      %951 = vmatmul.mubr.f32.gmra.mxu0 %v834
      %v952 = vpop.f32.mrf.mxu0
      %v953 = vadd.f32 0.0, %v952
      %v954 = vpop.f32.mrf.mxu0
      %955 = vmatprep.mubr.f32.mxu0 0.0
      %956 = vmatmul.mubr.f32.gmra.mxu0 %v837
      %v957 = vpop.f32.mrf.mxu0
      %v958 = vadd.f32 0.0, %v957
      %v959 = vpop.f32.mrf.mxu0
      %960 = vmatprep.mubr.f32.mxu0 0.0
      %961 = vmatmul.mubr.f32.gmra.mxu0 %v840
      %v962 = vpop.f32.mrf.mxu0
      %v963 = vadd.f32 0.0, %v962
      %v964 = vpop.f32.mrf.mxu0
      %965 = vmatprep.mubr.f32.mxu0 0.0
      %966 = vmatmul.mubr.f32.gmra.mxu0 %v843
      %v967 = vpop.f32.mrf.mxu0
      %v968 = vadd.f32 0.0, %v967
      %v969 = vpop.f32.mrf.mxu0
      %970 = vmatprep.mubr.f32.mxu0 0.0
      %971 = vmatmul.mubr.f32.gmra.mxu0 %v846
      %v972 = vpop.f32.mrf.mxu0
      %v973 = vadd.f32 0.0, %v972
      %v974 = vpop.f32.mrf.mxu0
      %975 = vmatprep.mubr.f32.mxu0 0.0
      %976 = vmatmul.mubr.f32.gmra.mxu0 %v849
      %v977 = vpop.f32.mrf.mxu0
      %v978 = vadd.f32 0.0, %v977
      %v979 = vpop.f32.mrf.mxu0
      %980 = vmatprep.mubr.f32.mxu0 0.0
      %981 = vmatmul.mubr.f32.gmra.mxu0 %v852
      %v982 = vpop.f32.mrf.mxu0
      %v983 = vadd.f32 0.0, %v982
      %v984 = vpop.f32.mrf.mxu0
      %985 = vmatprep.mubr.f32.mxu0 0.0
      %986 = vmatmul.mubr.f32.gmra.mxu0 %v855
      %v987 = vpop.f32.mrf.mxu0
      %v988 = vadd.f32 0.0, %v987
      %v989 = vpop.f32.mrf.mxu0
      %990 = vmatprep.mubr.f32.mxu0 0.0
      %991 = vmatmul.mubr.f32.gmra.mxu0 %v858
      %v992 = vpop.f32.mrf.mxu0
      %v993 = vadd.f32 0.0, %v992
      %v994 = vpop.f32.mrf.mxu0
      %995 = vmatprep.mubr.f32.mxu0 0.0
      %996 = vmatmul.mubr.f32.gmra.mxu0 %v861
      %v997 = vpop.f32.mrf.mxu0
      %v998 = vadd.f32 0.0, %v997
      %v999 = vpop.f32.mrf.mxu0
      %1000 = vmatprep.mubr.f32.mxu0 0.0
      %1001 = vmatmul.mubr.f32.gmra.mxu0 %v864
      %v1002 = vpop.f32.mrf.mxu0
      %v1003 = vadd.f32 0.0, %v1002
      %v1004 = vpop.f32.mrf.mxu0
      %1005 = vmatprep.mubr.f32.mxu0 0.0
      %1006 = vmatmul.mubr.f32.gmra.mxu0 %v867
      %v1007 = vpop.f32.mrf.mxu0
      %v1008 = vadd.f32 0.0, %v1007
      %v1009 = vpop.f32.mrf.mxu0
      %1010 = vmatprep.mubr.f32.mxu0 0.0
      %1011 = vmatmul.mubr.f32.gmra.mxu0 %v870
      %v1012 = vpop.f32.mrf.mxu0
      %v1013 = vadd.f32 0.0, %v1012
      %v1014 = vpop.f32.mrf.mxu0
      %1015 = vmatprep.mubr.f32.mxu0 0.0
      %1016 = vmatmul.mubr.f32.gmra.mxu0 %v873
      %v1017 = vpop.f32.mrf.mxu0
      %v1018 = vadd.f32 0.0, %v1017
      %v1019 = vpop.f32.mrf.mxu0
      %1020 = vmatprep.mubr.f32.mxu0 0.0
      %1021 = vmatmul.mubr.f32.gmra.mxu0 %v876
      %v1022 = vpop.f32.mrf.mxu0
      %v1023 = vadd.f32 0.0, %v1022
      %v1024 = vpop.f32.mrf.mxu0
      %1025 = vdwg.mxu0
      %v1026 = vadd.f32 %v794, %v948
      %v1027 = vadd.f32 %v795, %v953
      %v1028 = vadd.f32 %v796, %v958
      %v1029 = vadd.f32 %v797, %v963
      %v1030 = vadd.f32 %v798, %v968
      %v1031 = vadd.f32 %v799, %v973
      %v1032 = vadd.f32 %v800, %v978
      %v1033 = vadd.f32 %v801, %v983
      %v1034 = vadd.f32 %v802, %v988
      %v1035 = vadd.f32 %v803, %v993
      %v1036 = vadd.f32 %v804, %v998
      %v1037 = vadd.f32 %v805, %v1003
      %v1038 = vadd.f32 %v806, %v1008
      %v1039 = vadd.f32 %v807, %v1013
      %v1040 = vadd.f32 %v808, %v1018
      %v1041 = vadd.f32 %v809, %v1023
      %s1042 = sadd.s32 %s577, 576
      %s1043 = scalar_lea.vmem [#allocation2], %s1042
      %v1044 = vld [vmem:[%s1043] sm:$0xff]
      %v1045 = vld [vmem:[%s1043 + $0x8] sm:$0xff]
      %v1046 = vld [vmem:[%s1043 + $0x10] sm:$0xff]
      %v1047 = vld [vmem:[%s1043 + $0x18] sm:$0xff]
      %v1048 = vld [vmem:[%s1043 + $0x20] sm:$0xff]
      %v1049 = vld [vmem:[%s1043 + $0x28] sm:$0xff]
      %v1050 = vld [vmem:[%s1043 + $0x30] sm:$0xff]
      %v1051 = vld [vmem:[%s1043 + $0x38] sm:$0xff]
      %v1052 = vld [vmem:[%s1043 + $0x40] sm:$0xff]
      %v1053 = vld [vmem:[%s1043 + $0x48] sm:$0xff]
      %v1054 = vld [vmem:[%s1043 + $0x50] sm:$0xff]
      %v1055 = vld [vmem:[%s1043 + $0x58] sm:$0xff]
      %v1056 = vld [vmem:[%s1043 + $0x60] sm:$0xff]
      %v1057 = vld [vmem:[%s1043 + $0x68] sm:$0xff]
      %v1058 = vld [vmem:[%s1043 + $0x70] sm:$0xff]
      %v1059 = vld [vmem:[%s1043 + $0x78] sm:$0xff]
      %s1060 = scalar_lea.vmem %s1, 8
      %v1061 = vld [vmem:[%s1060] sm:$0xf]
      %v1063 = vsel %vm596, %v1044, 0
      %v1066 = vsel %vm596, %v1045, 0
      %v1069 = vsel %vm596, %v1046, 0
      %v1072 = vsel %vm596, %v1047, 0
      %v1075 = vsel %vm596, %v1048, 0
      %v1078 = vsel %vm596, %v1049, 0
      %v1081 = vsel %vm596, %v1050, 0
      %v1084 = vsel %vm596, %v1051, 0
      %v1087 = vsel %vm596, %v1052, 0
      %v1090 = vsel %vm596, %v1053, 0
      %v1093 = vsel %vm596, %v1054, 0
      %v1096 = vsel %vm596, %v1055, 0
      %v1099 = vsel %vm596, %v1056, 0
      %v1102 = vsel %vm596, %v1057, 0
      %v1105 = vsel %vm596, %v1058, 0
      %v1108 = vsel %vm596, %v1059, 0
      %v1111 = vsel %vm645, %v1061, 0
      %1113 = vmatprep.subr.mxu0 0.0
      %1114 = vmatpush1.msra.mxu0 0.0
      %1115 = vmatprep.subr.mxu0 0.0
      %1116 = vmatpush1.msra.mxu0 0.0
      %1117 = vmatprep.subr.mxu0 0.0
      %1118 = vmatpush1.msra.mxu0 0.0
      %1119 = vmatprep.subr.mxu0 0.0
      %1120 = vmatpush1.msra.mxu0 0.0
      %1121 = vmatprep.subr.mxu0 0.0
      %1122 = vmatpush1.msra.mxu0 0.0
      %1123 = vmatprep.subr.mxu0 0.0
      %1124 = vmatpush1.msra.mxu0 0.0
      %1125 = vmatprep.subr.mxu0 0.0
      %1126 = vmatpush1.msra.mxu0 0.0
      %1127 = vmatprep.subr.mxu0 0.0
      %1128 = vmatpush1.msra.mxu0 0.0
      %1129 = vmatprep.subr.mxu0 0.0
      %1130 = vmatpush1.msra.mxu0 0.0
      %1131 = vmatprep.subr.mxu0 0.0
      %1132 = vmatpush1.msra.mxu0 0.0
      %1133 = vmatprep.subr.mxu0 0.0
      %1134 = vmatpush1.msra.mxu0 0.0
      %1135 = vmatprep.subr.mxu0 0.0
      %1136 = vmatpush1.msra.mxu0 0.0
      %1137 = vmatprep.subr.mxu0 0.0
      %1138 = vmatpush1.msra.mxu0 0.0
      %1139 = vmatprep.subr.mxu0 0.0
      %1140 = vmatpush1.msra.mxu0 0.0
      %1141 = vmatprep.subr.mxu0 0.0
      %1142 = vmatpush1.msra.mxu0 0.0
      %1143 = vmatprep.subr.mxu0 0.0
      %1144 = vmatpush1.msra.mxu0 %v1111
      %1145 = vmatprep.subr.mxu0 0.0
      %1146 = vmatpush2.msra.mxu0 0.0
      %1147 = vmatprep.subr.mxu0 0.0
      %1148 = vmatpush2.msra.mxu0 0.0
      %1149 = vmatprep.subr.mxu0 0.0
      %1150 = vmatpush2.msra.mxu0 0.0
      %1151 = vmatprep.subr.mxu0 0.0
      %1152 = vmatpush2.msra.mxu0 0.0
      %1153 = vmatprep.subr.mxu0 0.0
      %1154 = vmatpush2.msra.mxu0 0.0
      %1155 = vmatprep.subr.mxu0 0.0
      %1156 = vmatpush2.msra.mxu0 0.0
      %1157 = vmatprep.subr.mxu0 0.0
      %1158 = vmatpush2.msra.mxu0 0.0
      %1159 = vmatprep.subr.mxu0 0.0
      %1160 = vmatpush2.msra.mxu0 0.0
      %1161 = vmatprep.subr.mxu0 0.0
      %1162 = vmatpush2.msra.mxu0 0.0
      %1163 = vmatprep.subr.mxu0 0.0
      %1164 = vmatpush2.msra.mxu0 0.0
      %1165 = vmatprep.subr.mxu0 0.0
      %1166 = vmatpush2.msra.mxu0 0.0
      %1167 = vmatprep.subr.mxu0 0.0
      %1168 = vmatpush2.msra.mxu0 0.0
      %1169 = vmatprep.subr.mxu0 0.0
      %1170 = vmatpush2.msra.mxu0 0.0
      %1171 = vmatprep.subr.mxu0 0.0
      %1172 = vmatpush2.msra.mxu0 0.0
      %1173 = vmatprep.subr.mxu0 0.0
      %1174 = vmatpush2.msra.mxu0 0.0
      %1175 = vmatprep.subr.mxu0 0.0
      %1176 = vmatpush2.msra.mxu0 0.0
      %1177 = vmatprep.mubr.f32.mxu0 0.0
      %1178 = vmatmul.mubr.f32.gmra.mxu0 %v1063
      %v1179 = vpop.f32.mrf.mxu0
      %v1180 = vadd.f32 0.0, %v1179
      %v1181 = vpop.f32.mrf.mxu0
      %1182 = vmatprep.mubr.f32.mxu0 0.0
      %1183 = vmatmul.mubr.f32.gmra.mxu0 %v1066
      %v1184 = vpop.f32.mrf.mxu0
      %v1185 = vadd.f32 0.0, %v1184
      %v1186 = vpop.f32.mrf.mxu0
      %1187 = vmatprep.mubr.f32.mxu0 0.0
      %1188 = vmatmul.mubr.f32.gmra.mxu0 %v1069
      %v1189 = vpop.f32.mrf.mxu0
      %v1190 = vadd.f32 0.0, %v1189
      %v1191 = vpop.f32.mrf.mxu0
      %1192 = vmatprep.mubr.f32.mxu0 0.0
      %1193 = vmatmul.mubr.f32.gmra.mxu0 %v1072
      %v1194 = vpop.f32.mrf.mxu0
      %v1195 = vadd.f32 0.0, %v1194
      %v1196 = vpop.f32.mrf.mxu0
      %1197 = vmatprep.mubr.f32.mxu0 0.0
      %1198 = vmatmul.mubr.f32.gmra.mxu0 %v1075
      %v1199 = vpop.f32.mrf.mxu0
      %v1200 = vadd.f32 0.0, %v1199
      %v1201 = vpop.f32.mrf.mxu0
      %1202 = vmatprep.mubr.f32.mxu0 0.0
      %1203 = vmatmul.mubr.f32.gmra.mxu0 %v1078
      %v1204 = vpop.f32.mrf.mxu0
      %v1205 = vadd.f32 0.0, %v1204
      %v1206 = vpop.f32.mrf.mxu0
      %1207 = vmatprep.mubr.f32.mxu0 0.0
      %1208 = vmatmul.mubr.f32.gmra.mxu0 %v1081
      %v1209 = vpop.f32.mrf.mxu0
      %v1210 = vadd.f32 0.0, %v1209
      %v1211 = vpop.f32.mrf.mxu0
      %1212 = vmatprep.mubr.f32.mxu0 0.0
      %1213 = vmatmul.mubr.f32.gmra.mxu0 %v1084
      %v1214 = vpop.f32.mrf.mxu0
      %v1215 = vadd.f32 0.0, %v1214
      %v1216 = vpop.f32.mrf.mxu0
      %1217 = vmatprep.mubr.f32.mxu0 0.0
      %1218 = vmatmul.mubr.f32.gmra.mxu0 %v1087
      %v1219 = vpop.f32.mrf.mxu0
      %v1220 = vadd.f32 0.0, %v1219
      %v1221 = vpop.f32.mrf.mxu0
      %1222 = vmatprep.mubr.f32.mxu0 0.0
      %1223 = vmatmul.mubr.f32.gmra.mxu0 %v1090
      %v1224 = vpop.f32.mrf.mxu0
      %v1225 = vadd.f32 0.0, %v1224
      %v1226 = vpop.f32.mrf.mxu0
      %1227 = vmatprep.mubr.f32.mxu0 0.0
      %1228 = vmatmul.mubr.f32.gmra.mxu0 %v1093
      %v1229 = vpop.f32.mrf.mxu0
      %v1230 = vadd.f32 0.0, %v1229
      %v1231 = vpop.f32.mrf.mxu0
      %1232 = vmatprep.mubr.f32.mxu0 0.0
      %1233 = vmatmul.mubr.f32.gmra.mxu0 %v1096
      %v1234 = vpop.f32.mrf.mxu0
      %v1235 = vadd.f32 0.0, %v1234
      %v1236 = vpop.f32.mrf.mxu0
      %1237 = vmatprep.mubr.f32.mxu0 0.0
      %1238 = vmatmul.mubr.f32.gmra.mxu0 %v1099
      %v1239 = vpop.f32.mrf.mxu0
      %v1240 = vadd.f32 0.0, %v1239
      %v1241 = vpop.f32.mrf.mxu0
      %1242 = vmatprep.mubr.f32.mxu0 0.0
      %1243 = vmatmul.mubr.f32.gmra.mxu0 %v1102
      %v1244 = vpop.f32.mrf.mxu0
      %v1245 = vadd.f32 0.0, %v1244
      %v1246 = vpop.f32.mrf.mxu0
      %1247 = vmatprep.mubr.f32.mxu0 0.0
      %1248 = vmatmul.mubr.f32.gmra.mxu0 %v1105
      %v1249 = vpop.f32.mrf.mxu0
      %v1250 = vadd.f32 0.0, %v1249
      %v1251 = vpop.f32.mrf.mxu0
      %1252 = vmatprep.mubr.f32.mxu0 0.0
      %1253 = vmatmul.mubr.f32.gmra.mxu0 %v1108
      %v1254 = vpop.f32.mrf.mxu0
      %v1255 = vadd.f32 0.0, %v1254
      %v1256 = vpop.f32.mrf.mxu0
      %1257 = vdwg.mxu0
      %v1258 = vadd.f32 %v1026, %v1180
      %v1259 = vadd.f32 %v1027, %v1185
      %v1260 = vadd.f32 %v1028, %v1190
      %v1261 = vadd.f32 %v1029, %v1195
      %v1262 = vadd.f32 %v1030, %v1200
      %v1263 = vadd.f32 %v1031, %v1205
      %v1264 = vadd.f32 %v1032, %v1210
      %v1265 = vadd.f32 %v1033, %v1215
      %v1266 = vadd.f32 %v1034, %v1220
      %v1267 = vadd.f32 %v1035, %v1225
      %v1268 = vadd.f32 %v1036, %v1230
      %v1269 = vadd.f32 %v1037, %v1235
      %v1270 = vadd.f32 %v1038, %v1240
      %v1271 = vadd.f32 %v1039, %v1245
      %v1272 = vadd.f32 %v1040, %v1250
      %v1273 = vadd.f32 %v1041, %v1255
      %s1274 = sadd.s32 %s569, 1
      %s1275 = smul.u32 %s1274, 16
      %s1276 = scalar_lea.vmem [#allocation2], %s1275
      %v1277 = vld [vmem:[%s1276] sm:$0xff]
      %v1278 = vld [vmem:[%s1276 + $0x8] sm:$0xff]
      %v1279 = vld [vmem:[%s1276 + $0x10] sm:$0xff]
      %v1280 = vld [vmem:[%s1276 + $0x18] sm:$0xff]
      %v1281 = vld [vmem:[%s1276 + $0x20] sm:$0xff]
      %v1282 = vld [vmem:[%s1276 + $0x28] sm:$0xff]
      %v1283 = vld [vmem:[%s1276 + $0x30] sm:$0xff]
      %v1284 = vld [vmem:[%s1276 + $0x38] sm:$0xff]
      %v1285 = vld [vmem:[%s1276 + $0x40] sm:$0xff]
      %v1286 = vld [vmem:[%s1276 + $0x48] sm:$0xff]
      %v1287 = vld [vmem:[%s1276 + $0x50] sm:$0xff]
      %v1288 = vld [vmem:[%s1276 + $0x58] sm:$0xff]
      %v1289 = vld [vmem:[%s1276 + $0x60] sm:$0xff]
      %v1290 = vld [vmem:[%s1276 + $0x68] sm:$0xff]
      %v1291 = vld [vmem:[%s1276 + $0x70] sm:$0xff]
      %v1292 = vld [vmem:[%s1276 + $0x78] sm:$0xff]
      %s1293 = scalar_lea.vmem %s1, 12
      %v1294 = vld [vmem:[%s1293] sm:$0xf]
      %v1296 = vsel %vm596, %v1277, 0
      %v1299 = vsel %vm596, %v1278, 0
      %v1302 = vsel %vm596, %v1279, 0
      %v1305 = vsel %vm596, %v1280, 0
      %v1308 = vsel %vm596, %v1281, 0
      %v1311 = vsel %vm596, %v1282, 0
      %v1314 = vsel %vm596, %v1283, 0
      %v1317 = vsel %vm596, %v1284, 0
      %v1320 = vsel %vm596, %v1285, 0
      %v1323 = vsel %vm596, %v1286, 0
      %v1326 = vsel %vm596, %v1287, 0
      %v1329 = vsel %vm596, %v1288, 0
      %v1332 = vsel %vm596, %v1289, 0
      %v1335 = vsel %vm596, %v1290, 0
      %v1338 = vsel %vm596, %v1291, 0
      %v1341 = vsel %vm596, %v1292, 0
      %v1344 = vsel %vm645, %v1294, 0
      %1346 = vmatprep.subr.mxu0 0.0
      %1347 = vmatpush1.msra.mxu0 0.0
      %1348 = vmatprep.subr.mxu0 0.0
      %1349 = vmatpush1.msra.mxu0 0.0
      %1350 = vmatprep.subr.mxu0 0.0
      %1351 = vmatpush1.msra.mxu0 0.0
      %1352 = vmatprep.subr.mxu0 0.0
      %1353 = vmatpush1.msra.mxu0 0.0
      %1354 = vmatprep.subr.mxu0 0.0
      %1355 = vmatpush1.msra.mxu0 0.0
      %1356 = vmatprep.subr.mxu0 0.0
      %1357 = vmatpush1.msra.mxu0 0.0
      %1358 = vmatprep.subr.mxu0 0.0
      %1359 = vmatpush1.msra.mxu0 0.0
      %1360 = vmatprep.subr.mxu0 0.0
      %1361 = vmatpush1.msra.mxu0 0.0
      %1362 = vmatprep.subr.mxu0 0.0
      %1363 = vmatpush1.msra.mxu0 0.0
      %1364 = vmatprep.subr.mxu0 0.0
      %1365 = vmatpush1.msra.mxu0 0.0
      %1366 = vmatprep.subr.mxu0 0.0
      %1367 = vmatpush1.msra.mxu0 0.0
      %1368 = vmatprep.subr.mxu0 0.0
      %1369 = vmatpush1.msra.mxu0 0.0
      %1370 = vmatprep.subr.mxu0 0.0
      %1371 = vmatpush1.msra.mxu0 0.0
      %1372 = vmatprep.subr.mxu0 0.0
      %1373 = vmatpush1.msra.mxu0 0.0
      %1374 = vmatprep.subr.mxu0 0.0
      %1375 = vmatpush1.msra.mxu0 0.0
      %1376 = vmatprep.subr.mxu0 0.0
      %1377 = vmatpush1.msra.mxu0 %v1344
      %1378 = vmatprep.subr.mxu0 0.0
      %1379 = vmatpush2.msra.mxu0 0.0
      %1380 = vmatprep.subr.mxu0 0.0
      %1381 = vmatpush2.msra.mxu0 0.0
      %1382 = vmatprep.subr.mxu0 0.0
      %1383 = vmatpush2.msra.mxu0 0.0
      %1384 = vmatprep.subr.mxu0 0.0
      %1385 = vmatpush2.msra.mxu0 0.0
      %1386 = vmatprep.subr.mxu0 0.0
      %1387 = vmatpush2.msra.mxu0 0.0
      %1388 = vmatprep.subr.mxu0 0.0
      %1389 = vmatpush2.msra.mxu0 0.0
      %1390 = vmatprep.subr.mxu0 0.0
      %1391 = vmatpush2.msra.mxu0 0.0
      %1392 = vmatprep.subr.mxu0 0.0
      %1393 = vmatpush2.msra.mxu0 0.0
      %1394 = vmatprep.subr.mxu0 0.0
      %1395 = vmatpush2.msra.mxu0 0.0
      %1396 = vmatprep.subr.mxu0 0.0
      %1397 = vmatpush2.msra.mxu0 0.0
      %1398 = vmatprep.subr.mxu0 0.0
      %1399 = vmatpush2.msra.mxu0 0.0
      %1400 = vmatprep.subr.mxu0 0.0
      %1401 = vmatpush2.msra.mxu0 0.0
      %1402 = vmatprep.subr.mxu0 0.0
      %1403 = vmatpush2.msra.mxu0 0.0
      %1404 = vmatprep.subr.mxu0 0.0
      %1405 = vmatpush2.msra.mxu0 0.0
      %1406 = vmatprep.subr.mxu0 0.0
      %1407 = vmatpush2.msra.mxu0 0.0
      %1408 = vmatprep.subr.mxu0 0.0
      %1409 = vmatpush2.msra.mxu0 0.0
      %1410 = vmatprep.mubr.f32.mxu0 0.0
      %1411 = vmatmul.mubr.f32.gmra.mxu0 %v1296
      %v1412 = vpop.f32.mrf.mxu0
      %v1413 = vadd.f32 0.0, %v1412
      %v1414 = vpop.f32.mrf.mxu0
      %1415 = vmatprep.mubr.f32.mxu0 0.0
      %1416 = vmatmul.mubr.f32.gmra.mxu0 %v1299
      %v1417 = vpop.f32.mrf.mxu0
      %v1418 = vadd.f32 0.0, %v1417
      %v1419 = vpop.f32.mrf.mxu0
      %1420 = vmatprep.mubr.f32.mxu0 0.0
      %1421 = vmatmul.mubr.f32.gmra.mxu0 %v1302
      %v1422 = vpop.f32.mrf.mxu0
      %v1423 = vadd.f32 0.0, %v1422
      %v1424 = vpop.f32.mrf.mxu0
      %1425 = vmatprep.mubr.f32.mxu0 0.0
      %1426 = vmatmul.mubr.f32.gmra.mxu0 %v1305
      %v1427 = vpop.f32.mrf.mxu0
      %v1428 = vadd.f32 0.0, %v1427
      %v1429 = vpop.f32.mrf.mxu0
      %1430 = vmatprep.mubr.f32.mxu0 0.0
      %1431 = vmatmul.mubr.f32.gmra.mxu0 %v1308
      %v1432 = vpop.f32.mrf.mxu0
      %v1433 = vadd.f32 0.0, %v1432
      %v1434 = vpop.f32.mrf.mxu0
      %1435 = vmatprep.mubr.f32.mxu0 0.0
      %1436 = vmatmul.mubr.f32.gmra.mxu0 %v1311
      %v1437 = vpop.f32.mrf.mxu0
      %v1438 = vadd.f32 0.0, %v1437
      %v1439 = vpop.f32.mrf.mxu0
      %1440 = vmatprep.mubr.f32.mxu0 0.0
      %1441 = vmatmul.mubr.f32.gmra.mxu0 %v1314
      %v1442 = vpop.f32.mrf.mxu0
      %v1443 = vadd.f32 0.0, %v1442
      %v1444 = vpop.f32.mrf.mxu0
      %1445 = vmatprep.mubr.f32.mxu0 0.0
      %1446 = vmatmul.mubr.f32.gmra.mxu0 %v1317
      %v1447 = vpop.f32.mrf.mxu0
      %v1448 = vadd.f32 0.0, %v1447
      %v1449 = vpop.f32.mrf.mxu0
      %1450 = vmatprep.mubr.f32.mxu0 0.0
      %1451 = vmatmul.mubr.f32.gmra.mxu0 %v1320
      %v1452 = vpop.f32.mrf.mxu0
      %v1453 = vadd.f32 0.0, %v1452
      %v1454 = vpop.f32.mrf.mxu0
      %1455 = vmatprep.mubr.f32.mxu0 0.0
      %1456 = vmatmul.mubr.f32.gmra.mxu0 %v1323
      %v1457 = vpop.f32.mrf.mxu0
      %v1458 = vadd.f32 0.0, %v1457
      %v1459 = vpop.f32.mrf.mxu0
      %1460 = vmatprep.mubr.f32.mxu0 0.0
      %1461 = vmatmul.mubr.f32.gmra.mxu0 %v1326
      %v1462 = vpop.f32.mrf.mxu0
      %v1463 = vadd.f32 0.0, %v1462
      %v1464 = vpop.f32.mrf.mxu0
      %1465 = vmatprep.mubr.f32.mxu0 0.0
      %1466 = vmatmul.mubr.f32.gmra.mxu0 %v1329
      %v1467 = vpop.f32.mrf.mxu0
      %v1468 = vadd.f32 0.0, %v1467
      %v1469 = vpop.f32.mrf.mxu0
      %1470 = vmatprep.mubr.f32.mxu0 0.0
      %1471 = vmatmul.mubr.f32.gmra.mxu0 %v1332
      %v1472 = vpop.f32.mrf.mxu0
      %v1473 = vadd.f32 0.0, %v1472
      %v1474 = vpop.f32.mrf.mxu0
      %1475 = vmatprep.mubr.f32.mxu0 0.0
      %1476 = vmatmul.mubr.f32.gmra.mxu0 %v1335
      %v1477 = vpop.f32.mrf.mxu0
      %v1478 = vadd.f32 0.0, %v1477
      %v1479 = vpop.f32.mrf.mxu0
      %1480 = vmatprep.mubr.f32.mxu0 0.0
      %1481 = vmatmul.mubr.f32.gmra.mxu0 %v1338
      %v1482 = vpop.f32.mrf.mxu0
      %v1483 = vadd.f32 0.0, %v1482
      %v1484 = vpop.f32.mrf.mxu0
      %1485 = vmatprep.mubr.f32.mxu0 0.0
      %1486 = vmatmul.mubr.f32.gmra.mxu0 %v1341
      %v1487 = vpop.f32.mrf.mxu0
      %v1488 = vadd.f32 0.0, %v1487
      %v1489 = vpop.f32.mrf.mxu0
      %1490 = vdwg.mxu0
      %v1491 = vadd.f32 %v1258, %v1413
      %v1492 = vadd.f32 %v1259, %v1418
      %v1493 = vadd.f32 %v1260, %v1423
      %v1494 = vadd.f32 %v1261, %v1428
      %v1495 = vadd.f32 %v1262, %v1433
      %v1496 = vadd.f32 %v1263, %v1438
      %v1497 = vadd.f32 %v1264, %v1443
      %v1498 = vadd.f32 %v1265, %v1448
      %v1499 = vadd.f32 %v1266, %v1453
      %v1500 = vadd.f32 %v1267, %v1458
      %v1501 = vadd.f32 %v1268, %v1463
      %v1502 = vadd.f32 %v1269, %v1468
      %v1503 = vadd.f32 %v1270, %v1473
      %v1504 = vadd.f32 %v1271, %v1478
      %v1505 = vadd.f32 %v1272, %v1483
      %v1506 = vadd.f32 %v1273, %v1488
      %s1507 = sadd.s32 %s1275, 288
      %s1508 = scalar_lea.vmem [#allocation2], %s1507
      %v1509 = vld [vmem:[%s1508] sm:$0xff]
      %v1510 = vld [vmem:[%s1508 + $0x8] sm:$0xff]
      %v1511 = vld [vmem:[%s1508 + $0x10] sm:$0xff]
      %v1512 = vld [vmem:[%s1508 + $0x18] sm:$0xff]
      %v1513 = vld [vmem:[%s1508 + $0x20] sm:$0xff]
      %v1514 = vld [vmem:[%s1508 + $0x28] sm:$0xff]
      %v1515 = vld [vmem:[%s1508 + $0x30] sm:$0xff]
      %v1516 = vld [vmem:[%s1508 + $0x38] sm:$0xff]
      %v1517 = vld [vmem:[%s1508 + $0x40] sm:$0xff]
      %v1518 = vld [vmem:[%s1508 + $0x48] sm:$0xff]
      %v1519 = vld [vmem:[%s1508 + $0x50] sm:$0xff]
      %v1520 = vld [vmem:[%s1508 + $0x58] sm:$0xff]
      %v1521 = vld [vmem:[%s1508 + $0x60] sm:$0xff]
      %v1522 = vld [vmem:[%s1508 + $0x68] sm:$0xff]
      %v1523 = vld [vmem:[%s1508 + $0x70] sm:$0xff]
      %v1524 = vld [vmem:[%s1508 + $0x78] sm:$0xff]
      %s1525 = scalar_lea.vmem %s1, 16
      %v1526 = vld [vmem:[%s1525] sm:$0xf]
      %v1528 = vsel %vm596, %v1509, 0
      %v1531 = vsel %vm596, %v1510, 0
      %v1534 = vsel %vm596, %v1511, 0
      %v1537 = vsel %vm596, %v1512, 0
      %v1540 = vsel %vm596, %v1513, 0
      %v1543 = vsel %vm596, %v1514, 0
      %v1546 = vsel %vm596, %v1515, 0
      %v1549 = vsel %vm596, %v1516, 0
      %v1552 = vsel %vm596, %v1517, 0
      %v1555 = vsel %vm596, %v1518, 0
      %v1558 = vsel %vm596, %v1519, 0
      %v1561 = vsel %vm596, %v1520, 0
      %v1564 = vsel %vm596, %v1521, 0
      %v1567 = vsel %vm596, %v1522, 0
      %v1570 = vsel %vm596, %v1523, 0
      %v1573 = vsel %vm596, %v1524, 0
      %v1576 = vsel %vm645, %v1526, 0
      %1578 = vmatprep.subr.mxu0 0.0
      %1579 = vmatpush1.msra.mxu0 0.0
      %1580 = vmatprep.subr.mxu0 0.0
      %1581 = vmatpush1.msra.mxu0 0.0
      %1582 = vmatprep.subr.mxu0 0.0
      %1583 = vmatpush1.msra.mxu0 0.0
      %1584 = vmatprep.subr.mxu0 0.0
      %1585 = vmatpush1.msra.mxu0 0.0
      %1586 = vmatprep.subr.mxu0 0.0
      %1587 = vmatpush1.msra.mxu0 0.0
      %1588 = vmatprep.subr.mxu0 0.0
      %1589 = vmatpush1.msra.mxu0 0.0
      %1590 = vmatprep.subr.mxu0 0.0
      %1591 = vmatpush1.msra.mxu0 0.0
      %1592 = vmatprep.subr.mxu0 0.0
      %1593 = vmatpush1.msra.mxu0 0.0
      %1594 = vmatprep.subr.mxu0 0.0
      %1595 = vmatpush1.msra.mxu0 0.0
      %1596 = vmatprep.subr.mxu0 0.0
      %1597 = vmatpush1.msra.mxu0 0.0
      %1598 = vmatprep.subr.mxu0 0.0
      %1599 = vmatpush1.msra.mxu0 0.0
      %1600 = vmatprep.subr.mxu0 0.0
      %1601 = vmatpush1.msra.mxu0 0.0
      %1602 = vmatprep.subr.mxu0 0.0
      %1603 = vmatpush1.msra.mxu0 0.0
      %1604 = vmatprep.subr.mxu0 0.0
      %1605 = vmatpush1.msra.mxu0 0.0
      %1606 = vmatprep.subr.mxu0 0.0
      %1607 = vmatpush1.msra.mxu0 0.0
      %1608 = vmatprep.subr.mxu0 0.0
      %1609 = vmatpush1.msra.mxu0 %v1576
      %1610 = vmatprep.subr.mxu0 0.0
      %1611 = vmatpush2.msra.mxu0 0.0
      %1612 = vmatprep.subr.mxu0 0.0
      %1613 = vmatpush2.msra.mxu0 0.0
      %1614 = vmatprep.subr.mxu0 0.0
      %1615 = vmatpush2.msra.mxu0 0.0
      %1616 = vmatprep.subr.mxu0 0.0
      %1617 = vmatpush2.msra.mxu0 0.0
      %1618 = vmatprep.subr.mxu0 0.0
      %1619 = vmatpush2.msra.mxu0 0.0
      %1620 = vmatprep.subr.mxu0 0.0
      %1621 = vmatpush2.msra.mxu0 0.0
      %1622 = vmatprep.subr.mxu0 0.0
      %1623 = vmatpush2.msra.mxu0 0.0
      %1624 = vmatprep.subr.mxu0 0.0
      %1625 = vmatpush2.msra.mxu0 0.0
      %1626 = vmatprep.subr.mxu0 0.0
      %1627 = vmatpush2.msra.mxu0 0.0
      %1628 = vmatprep.subr.mxu0 0.0
      %1629 = vmatpush2.msra.mxu0 0.0
      %1630 = vmatprep.subr.mxu0 0.0
      %1631 = vmatpush2.msra.mxu0 0.0
      %1632 = vmatprep.subr.mxu0 0.0
      %1633 = vmatpush2.msra.mxu0 0.0
      %1634 = vmatprep.subr.mxu0 0.0
      %1635 = vmatpush2.msra.mxu0 0.0
      %1636 = vmatprep.subr.mxu0 0.0
      %1637 = vmatpush2.msra.mxu0 0.0
      %1638 = vmatprep.subr.mxu0 0.0
      %1639 = vmatpush2.msra.mxu0 0.0
      %1640 = vmatprep.subr.mxu0 0.0
      %1641 = vmatpush2.msra.mxu0 0.0
      %1642 = vmatprep.mubr.f32.mxu0 0.0
      %1643 = vmatmul.mubr.f32.gmra.mxu0 %v1528
      %v1644 = vpop.f32.mrf.mxu0
      %v1645 = vadd.f32 0.0, %v1644
      %v1646 = vpop.f32.mrf.mxu0
      %1647 = vmatprep.mubr.f32.mxu0 0.0
      %1648 = vmatmul.mubr.f32.gmra.mxu0 %v1531
      %v1649 = vpop.f32.mrf.mxu0
      %v1650 = vadd.f32 0.0, %v1649
      %v1651 = vpop.f32.mrf.mxu0
      %1652 = vmatprep.mubr.f32.mxu0 0.0
      %1653 = vmatmul.mubr.f32.gmra.mxu0 %v1534
      %v1654 = vpop.f32.mrf.mxu0
      %v1655 = vadd.f32 0.0, %v1654
      %v1656 = vpop.f32.mrf.mxu0
      %1657 = vmatprep.mubr.f32.mxu0 0.0
      %1658 = vmatmul.mubr.f32.gmra.mxu0 %v1537
      %v1659 = vpop.f32.mrf.mxu0
      %v1660 = vadd.f32 0.0, %v1659
      %v1661 = vpop.f32.mrf.mxu0
      %1662 = vmatprep.mubr.f32.mxu0 0.0
      %1663 = vmatmul.mubr.f32.gmra.mxu0 %v1540
      %v1664 = vpop.f32.mrf.mxu0
      %v1665 = vadd.f32 0.0, %v1664
      %v1666 = vpop.f32.mrf.mxu0
      %1667 = vmatprep.mubr.f32.mxu0 0.0
      %1668 = vmatmul.mubr.f32.gmra.mxu0 %v1543
      %v1669 = vpop.f32.mrf.mxu0
      %v1670 = vadd.f32 0.0, %v1669
      %v1671 = vpop.f32.mrf.mxu0
      %1672 = vmatprep.mubr.f32.mxu0 0.0
      %1673 = vmatmul.mubr.f32.gmra.mxu0 %v1546
      %v1674 = vpop.f32.mrf.mxu0
      %v1675 = vadd.f32 0.0, %v1674
      %v1676 = vpop.f32.mrf.mxu0
      %1677 = vmatprep.mubr.f32.mxu0 0.0
      %1678 = vmatmul.mubr.f32.gmra.mxu0 %v1549
      %v1679 = vpop.f32.mrf.mxu0
      %v1680 = vadd.f32 0.0, %v1679
      %v1681 = vpop.f32.mrf.mxu0
      %1682 = vmatprep.mubr.f32.mxu0 0.0
      %1683 = vmatmul.mubr.f32.gmra.mxu0 %v1552
      %v1684 = vpop.f32.mrf.mxu0
      %v1685 = vadd.f32 0.0, %v1684
      %v1686 = vpop.f32.mrf.mxu0
      %1687 = vmatprep.mubr.f32.mxu0 0.0
      %1688 = vmatmul.mubr.f32.gmra.mxu0 %v1555
      %v1689 = vpop.f32.mrf.mxu0
      %v1690 = vadd.f32 0.0, %v1689
      %v1691 = vpop.f32.mrf.mxu0
      %1692 = vmatprep.mubr.f32.mxu0 0.0
      %1693 = vmatmul.mubr.f32.gmra.mxu0 %v1558
      %v1694 = vpop.f32.mrf.mxu0
      %v1695 = vadd.f32 0.0, %v1694
      %v1696 = vpop.f32.mrf.mxu0
      %1697 = vmatprep.mubr.f32.mxu0 0.0
      %1698 = vmatmul.mubr.f32.gmra.mxu0 %v1561
      %v1699 = vpop.f32.mrf.mxu0
      %v1700 = vadd.f32 0.0, %v1699
      %v1701 = vpop.f32.mrf.mxu0
      %1702 = vmatprep.mubr.f32.mxu0 0.0
      %1703 = vmatmul.mubr.f32.gmra.mxu0 %v1564
      %v1704 = vpop.f32.mrf.mxu0
      %v1705 = vadd.f32 0.0, %v1704
      %v1706 = vpop.f32.mrf.mxu0
      %1707 = vmatprep.mubr.f32.mxu0 0.0
      %1708 = vmatmul.mubr.f32.gmra.mxu0 %v1567
      %v1709 = vpop.f32.mrf.mxu0
      %v1710 = vadd.f32 0.0, %v1709
      %v1711 = vpop.f32.mrf.mxu0
      %1712 = vmatprep.mubr.f32.mxu0 0.0
      %1713 = vmatmul.mubr.f32.gmra.mxu0 %v1570
      %v1714 = vpop.f32.mrf.mxu0
      %v1715 = vadd.f32 0.0, %v1714
      %v1716 = vpop.f32.mrf.mxu0
      %1717 = vmatprep.mubr.f32.mxu0 0.0
      %1718 = vmatmul.mubr.f32.gmra.mxu0 %v1573
      %v1719 = vpop.f32.mrf.mxu0
      %v1720 = vadd.f32 0.0, %v1719
      %v1721 = vpop.f32.mrf.mxu0
      %1722 = vdwg.mxu0
      %v1723 = vadd.f32 %v1491, %v1645
      %v1724 = vadd.f32 %v1492, %v1650
      %v1725 = vadd.f32 %v1493, %v1655
      %v1726 = vadd.f32 %v1494, %v1660
      %v1727 = vadd.f32 %v1495, %v1665
      %v1728 = vadd.f32 %v1496, %v1670
      %v1729 = vadd.f32 %v1497, %v1675
      %v1730 = vadd.f32 %v1498, %v1680
      %v1731 = vadd.f32 %v1499, %v1685
      %v1732 = vadd.f32 %v1500, %v1690
      %v1733 = vadd.f32 %v1501, %v1695
      %v1734 = vadd.f32 %v1502, %v1700
      %v1735 = vadd.f32 %v1503, %v1705
      %v1736 = vadd.f32 %v1504, %v1710
      %v1737 = vadd.f32 %v1505, %v1715
      %v1738 = vadd.f32 %v1506, %v1720
      %s1739 = sadd.s32 %s1275, 576
      %s1740 = scalar_lea.vmem [#allocation2], %s1739
      %v1741 = vld [vmem:[%s1740] sm:$0xff]
      %v1742 = vld [vmem:[%s1740 + $0x8] sm:$0xff]
      %v1743 = vld [vmem:[%s1740 + $0x10] sm:$0xff]
      %v1744 = vld [vmem:[%s1740 + $0x18] sm:$0xff]
      %v1745 = vld [vmem:[%s1740 + $0x20] sm:$0xff]
      %v1746 = vld [vmem:[%s1740 + $0x28] sm:$0xff]
      %v1747 = vld [vmem:[%s1740 + $0x30] sm:$0xff]
      %v1748 = vld [vmem:[%s1740 + $0x38] sm:$0xff]
      %v1749 = vld [vmem:[%s1740 + $0x40] sm:$0xff]
      %v1750 = vld [vmem:[%s1740 + $0x48] sm:$0xff]
      %v1751 = vld [vmem:[%s1740 + $0x50] sm:$0xff]
      %v1752 = vld [vmem:[%s1740 + $0x58] sm:$0xff]
      %v1753 = vld [vmem:[%s1740 + $0x60] sm:$0xff]
      %v1754 = vld [vmem:[%s1740 + $0x68] sm:$0xff]
      %v1755 = vld [vmem:[%s1740 + $0x70] sm:$0xff]
      %v1756 = vld [vmem:[%s1740 + $0x78] sm:$0xff]
      %s1757 = scalar_lea.vmem %s1, 20
      %v1758 = vld [vmem:[%s1757] sm:$0xf]
      %v1760 = vsel %vm596, %v1741, 0
      %v1763 = vsel %vm596, %v1742, 0
      %v1766 = vsel %vm596, %v1743, 0
      %v1769 = vsel %vm596, %v1744, 0
      %v1772 = vsel %vm596, %v1745, 0
      %v1775 = vsel %vm596, %v1746, 0
      %v1778 = vsel %vm596, %v1747, 0
      %v1781 = vsel %vm596, %v1748, 0
      %v1784 = vsel %vm596, %v1749, 0
      %v1787 = vsel %vm596, %v1750, 0
      %v1790 = vsel %vm596, %v1751, 0
      %v1793 = vsel %vm596, %v1752, 0
      %v1796 = vsel %vm596, %v1753, 0
      %v1799 = vsel %vm596, %v1754, 0
      %v1802 = vsel %vm596, %v1755, 0
      %v1805 = vsel %vm596, %v1756, 0
      %v1808 = vsel %vm645, %v1758, 0
      %1810 = vmatprep.subr.mxu0 0.0
      %1811 = vmatpush1.msra.mxu0 0.0
      %1812 = vmatprep.subr.mxu0 0.0
      %1813 = vmatpush1.msra.mxu0 0.0
      %1814 = vmatprep.subr.mxu0 0.0
      %1815 = vmatpush1.msra.mxu0 0.0
      %1816 = vmatprep.subr.mxu0 0.0
      %1817 = vmatpush1.msra.mxu0 0.0
      %1818 = vmatprep.subr.mxu0 0.0
      %1819 = vmatpush1.msra.mxu0 0.0
      %1820 = vmatprep.subr.mxu0 0.0
      %1821 = vmatpush1.msra.mxu0 0.0
      %1822 = vmatprep.subr.mxu0 0.0
      %1823 = vmatpush1.msra.mxu0 0.0
      %1824 = vmatprep.subr.mxu0 0.0
      %1825 = vmatpush1.msra.mxu0 0.0
      %1826 = vmatprep.subr.mxu0 0.0
      %1827 = vmatpush1.msra.mxu0 0.0
      %1828 = vmatprep.subr.mxu0 0.0
      %1829 = vmatpush1.msra.mxu0 0.0
      %1830 = vmatprep.subr.mxu0 0.0
      %1831 = vmatpush1.msra.mxu0 0.0
      %1832 = vmatprep.subr.mxu0 0.0
      %1833 = vmatpush1.msra.mxu0 0.0
      %1834 = vmatprep.subr.mxu0 0.0
      %1835 = vmatpush1.msra.mxu0 0.0
      %1836 = vmatprep.subr.mxu0 0.0
      %1837 = vmatpush1.msra.mxu0 0.0
      %1838 = vmatprep.subr.mxu0 0.0
      %1839 = vmatpush1.msra.mxu0 0.0
      %1840 = vmatprep.subr.mxu0 0.0
      %1841 = vmatpush1.msra.mxu0 %v1808
      %1842 = vmatprep.subr.mxu0 0.0
      %1843 = vmatpush2.msra.mxu0 0.0
      %1844 = vmatprep.subr.mxu0 0.0
      %1845 = vmatpush2.msra.mxu0 0.0
      %1846 = vmatprep.subr.mxu0 0.0
      %1847 = vmatpush2.msra.mxu0 0.0
      %1848 = vmatprep.subr.mxu0 0.0
      %1849 = vmatpush2.msra.mxu0 0.0
      %1850 = vmatprep.subr.mxu0 0.0
      %1851 = vmatpush2.msra.mxu0 0.0
      %1852 = vmatprep.subr.mxu0 0.0
      %1853 = vmatpush2.msra.mxu0 0.0
      %1854 = vmatprep.subr.mxu0 0.0
      %1855 = vmatpush2.msra.mxu0 0.0
      %1856 = vmatprep.subr.mxu0 0.0
      %1857 = vmatpush2.msra.mxu0 0.0
      %1858 = vmatprep.subr.mxu0 0.0
      %1859 = vmatpush2.msra.mxu0 0.0
      %1860 = vmatprep.subr.mxu0 0.0
      %1861 = vmatpush2.msra.mxu0 0.0
      %1862 = vmatprep.subr.mxu0 0.0
      %1863 = vmatpush2.msra.mxu0 0.0
      %1864 = vmatprep.subr.mxu0 0.0
      %1865 = vmatpush2.msra.mxu0 0.0
      %1866 = vmatprep.subr.mxu0 0.0
      %1867 = vmatpush2.msra.mxu0 0.0
      %1868 = vmatprep.subr.mxu0 0.0
      %1869 = vmatpush2.msra.mxu0 0.0
      %1870 = vmatprep.subr.mxu0 0.0
      %1871 = vmatpush2.msra.mxu0 0.0
      %1872 = vmatprep.subr.mxu0 0.0
      %1873 = vmatpush2.msra.mxu0 0.0
      %1874 = vmatprep.mubr.f32.mxu0 0.0
      %1875 = vmatmul.mubr.f32.gmra.mxu0 %v1760
      %v1876 = vpop.f32.mrf.mxu0
      %v1877 = vadd.f32 0.0, %v1876
      %v1878 = vpop.f32.mrf.mxu0
      %1879 = vmatprep.mubr.f32.mxu0 0.0
      %1880 = vmatmul.mubr.f32.gmra.mxu0 %v1763
      %v1881 = vpop.f32.mrf.mxu0
      %v1882 = vadd.f32 0.0, %v1881
      %v1883 = vpop.f32.mrf.mxu0
      %1884 = vmatprep.mubr.f32.mxu0 0.0
      %1885 = vmatmul.mubr.f32.gmra.mxu0 %v1766
      %v1886 = vpop.f32.mrf.mxu0
      %v1887 = vadd.f32 0.0, %v1886
      %v1888 = vpop.f32.mrf.mxu0
      %1889 = vmatprep.mubr.f32.mxu0 0.0
      %1890 = vmatmul.mubr.f32.gmra.mxu0 %v1769
      %v1891 = vpop.f32.mrf.mxu0
      %v1892 = vadd.f32 0.0, %v1891
      %v1893 = vpop.f32.mrf.mxu0
      %1894 = vmatprep.mubr.f32.mxu0 0.0
      %1895 = vmatmul.mubr.f32.gmra.mxu0 %v1772
      %v1896 = vpop.f32.mrf.mxu0
      %v1897 = vadd.f32 0.0, %v1896
      %v1898 = vpop.f32.mrf.mxu0
      %1899 = vmatprep.mubr.f32.mxu0 0.0
      %1900 = vmatmul.mubr.f32.gmra.mxu0 %v1775
      %v1901 = vpop.f32.mrf.mxu0
      %v1902 = vadd.f32 0.0, %v1901
      %v1903 = vpop.f32.mrf.mxu0
      %1904 = vmatprep.mubr.f32.mxu0 0.0
      %1905 = vmatmul.mubr.f32.gmra.mxu0 %v1778
      %v1906 = vpop.f32.mrf.mxu0
      %v1907 = vadd.f32 0.0, %v1906
      %v1908 = vpop.f32.mrf.mxu0
      %1909 = vmatprep.mubr.f32.mxu0 0.0
      %1910 = vmatmul.mubr.f32.gmra.mxu0 %v1781
      %v1911 = vpop.f32.mrf.mxu0
      %v1912 = vadd.f32 0.0, %v1911
      %v1913 = vpop.f32.mrf.mxu0
      %1914 = vmatprep.mubr.f32.mxu0 0.0
      %1915 = vmatmul.mubr.f32.gmra.mxu0 %v1784
      %v1916 = vpop.f32.mrf.mxu0
      %v1917 = vadd.f32 0.0, %v1916
      %v1918 = vpop.f32.mrf.mxu0
      %1919 = vmatprep.mubr.f32.mxu0 0.0
      %1920 = vmatmul.mubr.f32.gmra.mxu0 %v1787
      %v1921 = vpop.f32.mrf.mxu0
      %v1922 = vadd.f32 0.0, %v1921
      %v1923 = vpop.f32.mrf.mxu0
      %1924 = vmatprep.mubr.f32.mxu0 0.0
      %1925 = vmatmul.mubr.f32.gmra.mxu0 %v1790
      %v1926 = vpop.f32.mrf.mxu0
      %v1927 = vadd.f32 0.0, %v1926
      %v1928 = vpop.f32.mrf.mxu0
      %1929 = vmatprep.mubr.f32.mxu0 0.0
      %1930 = vmatmul.mubr.f32.gmra.mxu0 %v1793
      %v1931 = vpop.f32.mrf.mxu0
      %v1932 = vadd.f32 0.0, %v1931
      %v1933 = vpop.f32.mrf.mxu0
      %1934 = vmatprep.mubr.f32.mxu0 0.0
      %1935 = vmatmul.mubr.f32.gmra.mxu0 %v1796
      %v1936 = vpop.f32.mrf.mxu0
      %v1937 = vadd.f32 0.0, %v1936
      %v1938 = vpop.f32.mrf.mxu0
      %1939 = vmatprep.mubr.f32.mxu0 0.0
      %1940 = vmatmul.mubr.f32.gmra.mxu0 %v1799
      %v1941 = vpop.f32.mrf.mxu0
      %v1942 = vadd.f32 0.0, %v1941
      %v1943 = vpop.f32.mrf.mxu0
      %1944 = vmatprep.mubr.f32.mxu0 0.0
      %1945 = vmatmul.mubr.f32.gmra.mxu0 %v1802
      %v1946 = vpop.f32.mrf.mxu0
      %v1947 = vadd.f32 0.0, %v1946
      %v1948 = vpop.f32.mrf.mxu0
      %1949 = vmatprep.mubr.f32.mxu0 0.0
      %1950 = vmatmul.mubr.f32.gmra.mxu0 %v1805
      %v1951 = vpop.f32.mrf.mxu0
      %v1952 = vadd.f32 0.0, %v1951
      %v1953 = vpop.f32.mrf.mxu0
      %1954 = vdwg.mxu0
      %v1955 = vadd.f32 %v1723, %v1877
      %v1956 = vadd.f32 %v1724, %v1882
      %v1957 = vadd.f32 %v1725, %v1887
      %v1958 = vadd.f32 %v1726, %v1892
      %v1959 = vadd.f32 %v1727, %v1897
      %v1960 = vadd.f32 %v1728, %v1902
      %v1961 = vadd.f32 %v1729, %v1907
      %v1962 = vadd.f32 %v1730, %v1912
      %v1963 = vadd.f32 %v1731, %v1917
      %v1964 = vadd.f32 %v1732, %v1922
      %v1965 = vadd.f32 %v1733, %v1927
      %v1966 = vadd.f32 %v1734, %v1932
      %v1967 = vadd.f32 %v1735, %v1937
      %v1968 = vadd.f32 %v1736, %v1942
      %v1969 = vadd.f32 %v1737, %v1947
      %v1970 = vadd.f32 %v1738, %v1952
      %s1971 = sadd.s32 %s569, 2
      %s1972 = smul.u32 %s1971, 16
      %s1973 = scalar_lea.vmem [#allocation2], %s1972
      %v1974 = vld [vmem:[%s1973] sm:$0xff]
      %v1975 = vld [vmem:[%s1973 + $0x8] sm:$0xff]
      %v1976 = vld [vmem:[%s1973 + $0x10] sm:$0xff]
      %v1977 = vld [vmem:[%s1973 + $0x18] sm:$0xff]
      %v1978 = vld [vmem:[%s1973 + $0x20] sm:$0xff]
      %v1979 = vld [vmem:[%s1973 + $0x28] sm:$0xff]
      %v1980 = vld [vmem:[%s1973 + $0x30] sm:$0xff]
      %v1981 = vld [vmem:[%s1973 + $0x38] sm:$0xff]
      %v1982 = vld [vmem:[%s1973 + $0x40] sm:$0xff]
      %v1983 = vld [vmem:[%s1973 + $0x48] sm:$0xff]
      %v1984 = vld [vmem:[%s1973 + $0x50] sm:$0xff]
      %v1985 = vld [vmem:[%s1973 + $0x58] sm:$0xff]
      %v1986 = vld [vmem:[%s1973 + $0x60] sm:$0xff]
      %v1987 = vld [vmem:[%s1973 + $0x68] sm:$0xff]
      %v1988 = vld [vmem:[%s1973 + $0x70] sm:$0xff]
      %v1989 = vld [vmem:[%s1973 + $0x78] sm:$0xff]
      %s1990 = scalar_lea.vmem %s1, 24
      %v1991 = vld [vmem:[%s1990] sm:$0xf]
      %v1993 = vsel %vm596, %v1974, 0
      %v1996 = vsel %vm596, %v1975, 0
      %v1999 = vsel %vm596, %v1976, 0
      %v2002 = vsel %vm596, %v1977, 0
      %v2005 = vsel %vm596, %v1978, 0
      %v2008 = vsel %vm596, %v1979, 0
      %v2011 = vsel %vm596, %v1980, 0
      %v2014 = vsel %vm596, %v1981, 0
      %v2017 = vsel %vm596, %v1982, 0
      %v2020 = vsel %vm596, %v1983, 0
      %v2023 = vsel %vm596, %v1984, 0
      %v2026 = vsel %vm596, %v1985, 0
      %v2029 = vsel %vm596, %v1986, 0
      %v2032 = vsel %vm596, %v1987, 0
      %v2035 = vsel %vm596, %v1988, 0
      %v2038 = vsel %vm596, %v1989, 0
      %v2041 = vsel %vm645, %v1991, 0
      %2043 = vmatprep.subr.mxu0 0.0
      %2044 = vmatpush1.msra.mxu0 0.0
      %2045 = vmatprep.subr.mxu0 0.0
      %2046 = vmatpush1.msra.mxu0 0.0
      %2047 = vmatprep.subr.mxu0 0.0
      %2048 = vmatpush1.msra.mxu0 0.0
      %2049 = vmatprep.subr.mxu0 0.0
      %2050 = vmatpush1.msra.mxu0 0.0
      %2051 = vmatprep.subr.mxu0 0.0
      %2052 = vmatpush1.msra.mxu0 0.0
      %2053 = vmatprep.subr.mxu0 0.0
      %2054 = vmatpush1.msra.mxu0 0.0
      %2055 = vmatprep.subr.mxu0 0.0
      %2056 = vmatpush1.msra.mxu0 0.0
      %2057 = vmatprep.subr.mxu0 0.0
      %2058 = vmatpush1.msra.mxu0 0.0
      %2059 = vmatprep.subr.mxu0 0.0
      %2060 = vmatpush1.msra.mxu0 0.0
      %2061 = vmatprep.subr.mxu0 0.0
      %2062 = vmatpush1.msra.mxu0 0.0
      %2063 = vmatprep.subr.mxu0 0.0
      %2064 = vmatpush1.msra.mxu0 0.0
      %2065 = vmatprep.subr.mxu0 0.0
      %2066 = vmatpush1.msra.mxu0 0.0
      %2067 = vmatprep.subr.mxu0 0.0
      %2068 = vmatpush1.msra.mxu0 0.0
      %2069 = vmatprep.subr.mxu0 0.0
      %2070 = vmatpush1.msra.mxu0 0.0
      %2071 = vmatprep.subr.mxu0 0.0
      %2072 = vmatpush1.msra.mxu0 0.0
      %2073 = vmatprep.subr.mxu0 0.0
      %2074 = vmatpush1.msra.mxu0 %v2041
      %2075 = vmatprep.subr.mxu0 0.0
      %2076 = vmatpush2.msra.mxu0 0.0
      %2077 = vmatprep.subr.mxu0 0.0
      %2078 = vmatpush2.msra.mxu0 0.0
      %2079 = vmatprep.subr.mxu0 0.0
      %2080 = vmatpush2.msra.mxu0 0.0
      %2081 = vmatprep.subr.mxu0 0.0
      %2082 = vmatpush2.msra.mxu0 0.0
      %2083 = vmatprep.subr.mxu0 0.0
      %2084 = vmatpush2.msra.mxu0 0.0
      %2085 = vmatprep.subr.mxu0 0.0
      %2086 = vmatpush2.msra.mxu0 0.0
      %2087 = vmatprep.subr.mxu0 0.0
      %2088 = vmatpush2.msra.mxu0 0.0
      %2089 = vmatprep.subr.mxu0 0.0
      %2090 = vmatpush2.msra.mxu0 0.0
      %2091 = vmatprep.subr.mxu0 0.0
      %2092 = vmatpush2.msra.mxu0 0.0
      %2093 = vmatprep.subr.mxu0 0.0
      %2094 = vmatpush2.msra.mxu0 0.0
      %2095 = vmatprep.subr.mxu0 0.0
      %2096 = vmatpush2.msra.mxu0 0.0
      %2097 = vmatprep.subr.mxu0 0.0
      %2098 = vmatpush2.msra.mxu0 0.0
      %2099 = vmatprep.subr.mxu0 0.0
      %2100 = vmatpush2.msra.mxu0 0.0
      %2101 = vmatprep.subr.mxu0 0.0
      %2102 = vmatpush2.msra.mxu0 0.0
      %2103 = vmatprep.subr.mxu0 0.0
      %2104 = vmatpush2.msra.mxu0 0.0
      %2105 = vmatprep.subr.mxu0 0.0
      %2106 = vmatpush2.msra.mxu0 0.0
      %2107 = vmatprep.mubr.f32.mxu0 0.0
      %2108 = vmatmul.mubr.f32.gmra.mxu0 %v1993
      %v2109 = vpop.f32.mrf.mxu0
      %v2110 = vadd.f32 0.0, %v2109
      %v2111 = vpop.f32.mrf.mxu0
      %2112 = vmatprep.mubr.f32.mxu0 0.0
      %2113 = vmatmul.mubr.f32.gmra.mxu0 %v1996
      %v2114 = vpop.f32.mrf.mxu0
      %v2115 = vadd.f32 0.0, %v2114
      %v2116 = vpop.f32.mrf.mxu0
      %2117 = vmatprep.mubr.f32.mxu0 0.0
      %2118 = vmatmul.mubr.f32.gmra.mxu0 %v1999
      %v2119 = vpop.f32.mrf.mxu0
      %v2120 = vadd.f32 0.0, %v2119
      %v2121 = vpop.f32.mrf.mxu0
      %2122 = vmatprep.mubr.f32.mxu0 0.0
      %2123 = vmatmul.mubr.f32.gmra.mxu0 %v2002
      %v2124 = vpop.f32.mrf.mxu0
      %v2125 = vadd.f32 0.0, %v2124
      %v2126 = vpop.f32.mrf.mxu0
      %2127 = vmatprep.mubr.f32.mxu0 0.0
      %2128 = vmatmul.mubr.f32.gmra.mxu0 %v2005
      %v2129 = vpop.f32.mrf.mxu0
      %v2130 = vadd.f32 0.0, %v2129
      %v2131 = vpop.f32.mrf.mxu0
      %2132 = vmatprep.mubr.f32.mxu0 0.0
      %2133 = vmatmul.mubr.f32.gmra.mxu0 %v2008
      %v2134 = vpop.f32.mrf.mxu0
      %v2135 = vadd.f32 0.0, %v2134
      %v2136 = vpop.f32.mrf.mxu0
      %2137 = vmatprep.mubr.f32.mxu0 0.0
      %2138 = vmatmul.mubr.f32.gmra.mxu0 %v2011
      %v2139 = vpop.f32.mrf.mxu0
      %v2140 = vadd.f32 0.0, %v2139
      %v2141 = vpop.f32.mrf.mxu0
      %2142 = vmatprep.mubr.f32.mxu0 0.0
      %2143 = vmatmul.mubr.f32.gmra.mxu0 %v2014
      %v2144 = vpop.f32.mrf.mxu0
      %v2145 = vadd.f32 0.0, %v2144
      %v2146 = vpop.f32.mrf.mxu0
      %2147 = vmatprep.mubr.f32.mxu0 0.0
      %2148 = vmatmul.mubr.f32.gmra.mxu0 %v2017
      %v2149 = vpop.f32.mrf.mxu0
      %v2150 = vadd.f32 0.0, %v2149
      %v2151 = vpop.f32.mrf.mxu0
      %2152 = vmatprep.mubr.f32.mxu0 0.0
      %2153 = vmatmul.mubr.f32.gmra.mxu0 %v2020
      %v2154 = vpop.f32.mrf.mxu0
      %v2155 = vadd.f32 0.0, %v2154
      %v2156 = vpop.f32.mrf.mxu0
      %2157 = vmatprep.mubr.f32.mxu0 0.0
      %2158 = vmatmul.mubr.f32.gmra.mxu0 %v2023
      %v2159 = vpop.f32.mrf.mxu0
      %v2160 = vadd.f32 0.0, %v2159
      %v2161 = vpop.f32.mrf.mxu0
      %2162 = vmatprep.mubr.f32.mxu0 0.0
      %2163 = vmatmul.mubr.f32.gmra.mxu0 %v2026
      %v2164 = vpop.f32.mrf.mxu0
      %v2165 = vadd.f32 0.0, %v2164
      %v2166 = vpop.f32.mrf.mxu0
      %2167 = vmatprep.mubr.f32.mxu0 0.0
      %2168 = vmatmul.mubr.f32.gmra.mxu0 %v2029
      %v2169 = vpop.f32.mrf.mxu0
      %v2170 = vadd.f32 0.0, %v2169
      %v2171 = vpop.f32.mrf.mxu0
      %2172 = vmatprep.mubr.f32.mxu0 0.0
      %2173 = vmatmul.mubr.f32.gmra.mxu0 %v2032
      %v2174 = vpop.f32.mrf.mxu0
      %v2175 = vadd.f32 0.0, %v2174
      %v2176 = vpop.f32.mrf.mxu0
      %2177 = vmatprep.mubr.f32.mxu0 0.0
      %2178 = vmatmul.mubr.f32.gmra.mxu0 %v2035
      %v2179 = vpop.f32.mrf.mxu0
      %v2180 = vadd.f32 0.0, %v2179
      %v2181 = vpop.f32.mrf.mxu0
      %2182 = vmatprep.mubr.f32.mxu0 0.0
      %2183 = vmatmul.mubr.f32.gmra.mxu0 %v2038
      %v2184 = vpop.f32.mrf.mxu0
      %v2185 = vadd.f32 0.0, %v2184
      %v2186 = vpop.f32.mrf.mxu0
      %2187 = vdwg.mxu0
      %v2188 = vadd.f32 %v1955, %v2110
      %v2189 = vadd.f32 %v1956, %v2115
      %v2190 = vadd.f32 %v1957, %v2120
      %v2191 = vadd.f32 %v1958, %v2125
      %v2192 = vadd.f32 %v1959, %v2130
      %v2193 = vadd.f32 %v1960, %v2135
      %v2194 = vadd.f32 %v1961, %v2140
      %v2195 = vadd.f32 %v1962, %v2145
      %v2196 = vadd.f32 %v1963, %v2150
      %v2197 = vadd.f32 %v1964, %v2155
      %v2198 = vadd.f32 %v1965, %v2160
      %v2199 = vadd.f32 %v1966, %v2165
      %v2200 = vadd.f32 %v1967, %v2170
      %v2201 = vadd.f32 %v1968, %v2175
      %v2202 = vadd.f32 %v1969, %v2180
      %v2203 = vadd.f32 %v1970, %v2185
      %s2204 = sadd.s32 %s1972, 288
      %s2205 = scalar_lea.vmem [#allocation2], %s2204
      %v2206 = vld [vmem:[%s2205] sm:$0xff]
      %v2207 = vld [vmem:[%s2205 + $0x8] sm:$0xff]
      %v2208 = vld [vmem:[%s2205 + $0x10] sm:$0xff]
      %v2209 = vld [vmem:[%s2205 + $0x18] sm:$0xff]
      %v2210 = vld [vmem:[%s2205 + $0x20] sm:$0xff]
      %v2211 = vld [vmem:[%s2205 + $0x28] sm:$0xff]
      %v2212 = vld [vmem:[%s2205 + $0x30] sm:$0xff]
      %v2213 = vld [vmem:[%s2205 + $0x38] sm:$0xff]
      %v2214 = vld [vmem:[%s2205 + $0x40] sm:$0xff]
      %v2215 = vld [vmem:[%s2205 + $0x48] sm:$0xff]
      %v2216 = vld [vmem:[%s2205 + $0x50] sm:$0xff]
      %v2217 = vld [vmem:[%s2205 + $0x58] sm:$0xff]
      %v2218 = vld [vmem:[%s2205 + $0x60] sm:$0xff]
      %v2219 = vld [vmem:[%s2205 + $0x68] sm:$0xff]
      %v2220 = vld [vmem:[%s2205 + $0x70] sm:$0xff]
      %v2221 = vld [vmem:[%s2205 + $0x78] sm:$0xff]
      %s2222 = scalar_lea.vmem %s1, 28
      %v2223 = vld [vmem:[%s2222] sm:$0xf]
      %v2225 = vsel %vm596, %v2206, 0
      %v2228 = vsel %vm596, %v2207, 0
      %v2231 = vsel %vm596, %v2208, 0
      %v2234 = vsel %vm596, %v2209, 0
      %v2237 = vsel %vm596, %v2210, 0
      %v2240 = vsel %vm596, %v2211, 0
      %v2243 = vsel %vm596, %v2212, 0
      %v2246 = vsel %vm596, %v2213, 0
      %v2249 = vsel %vm596, %v2214, 0
      %v2252 = vsel %vm596, %v2215, 0
      %v2255 = vsel %vm596, %v2216, 0
      %v2258 = vsel %vm596, %v2217, 0
      %v2261 = vsel %vm596, %v2218, 0
      %v2264 = vsel %vm596, %v2219, 0
      %v2267 = vsel %vm596, %v2220, 0
      %v2270 = vsel %vm596, %v2221, 0
      %v2273 = vsel %vm645, %v2223, 0
      %2275 = vmatprep.subr.mxu0 0.0
      %2276 = vmatpush1.msra.mxu0 0.0
      %2277 = vmatprep.subr.mxu0 0.0
      %2278 = vmatpush1.msra.mxu0 0.0
      %2279 = vmatprep.subr.mxu0 0.0
      %2280 = vmatpush1.msra.mxu0 0.0
      %2281 = vmatprep.subr.mxu0 0.0
      %2282 = vmatpush1.msra.mxu0 0.0
      %2283 = vmatprep.subr.mxu0 0.0
      %2284 = vmatpush1.msra.mxu0 0.0
      %2285 = vmatprep.subr.mxu0 0.0
      %2286 = vmatpush1.msra.mxu0 0.0
      %2287 = vmatprep.subr.mxu0 0.0
      %2288 = vmatpush1.msra.mxu0 0.0
      %2289 = vmatprep.subr.mxu0 0.0
      %2290 = vmatpush1.msra.mxu0 0.0
      %2291 = vmatprep.subr.mxu0 0.0
      %2292 = vmatpush1.msra.mxu0 0.0
      %2293 = vmatprep.subr.mxu0 0.0
      %2294 = vmatpush1.msra.mxu0 0.0
      %2295 = vmatprep.subr.mxu0 0.0
      %2296 = vmatpush1.msra.mxu0 0.0
      %2297 = vmatprep.subr.mxu0 0.0
      %2298 = vmatpush1.msra.mxu0 0.0
      %2299 = vmatprep.subr.mxu0 0.0
      %2300 = vmatpush1.msra.mxu0 0.0
      %2301 = vmatprep.subr.mxu0 0.0
      %2302 = vmatpush1.msra.mxu0 0.0
      %2303 = vmatprep.subr.mxu0 0.0
      %2304 = vmatpush1.msra.mxu0 0.0
      %2305 = vmatprep.subr.mxu0 0.0
      %2306 = vmatpush1.msra.mxu0 %v2273
      %2307 = vmatprep.subr.mxu0 0.0
      %2308 = vmatpush2.msra.mxu0 0.0
      %2309 = vmatprep.subr.mxu0 0.0
      %2310 = vmatpush2.msra.mxu0 0.0
      %2311 = vmatprep.subr.mxu0 0.0
      %2312 = vmatpush2.msra.mxu0 0.0
      %2313 = vmatprep.subr.mxu0 0.0
      %2314 = vmatpush2.msra.mxu0 0.0
      %2315 = vmatprep.subr.mxu0 0.0
      %2316 = vmatpush2.msra.mxu0 0.0
      %2317 = vmatprep.subr.mxu0 0.0
      %2318 = vmatpush2.msra.mxu0 0.0
      %2319 = vmatprep.subr.mxu0 0.0
      %2320 = vmatpush2.msra.mxu0 0.0
      %2321 = vmatprep.subr.mxu0 0.0
      %2322 = vmatpush2.msra.mxu0 0.0
      %2323 = vmatprep.subr.mxu0 0.0
      %2324 = vmatpush2.msra.mxu0 0.0
      %2325 = vmatprep.subr.mxu0 0.0
      %2326 = vmatpush2.msra.mxu0 0.0
      %2327 = vmatprep.subr.mxu0 0.0
      %2328 = vmatpush2.msra.mxu0 0.0
      %2329 = vmatprep.subr.mxu0 0.0
      %2330 = vmatpush2.msra.mxu0 0.0
      %2331 = vmatprep.subr.mxu0 0.0
      %2332 = vmatpush2.msra.mxu0 0.0
      %2333 = vmatprep.subr.mxu0 0.0
      %2334 = vmatpush2.msra.mxu0 0.0
      %2335 = vmatprep.subr.mxu0 0.0
      %2336 = vmatpush2.msra.mxu0 0.0
      %2337 = vmatprep.subr.mxu0 0.0
      %2338 = vmatpush2.msra.mxu0 0.0
      %2339 = vmatprep.mubr.f32.mxu0 0.0
      %2340 = vmatmul.mubr.f32.gmra.mxu0 %v2225
      %v2341 = vpop.f32.mrf.mxu0
      %v2342 = vadd.f32 0.0, %v2341
      %v2343 = vpop.f32.mrf.mxu0
      %2344 = vmatprep.mubr.f32.mxu0 0.0
      %2345 = vmatmul.mubr.f32.gmra.mxu0 %v2228
      %v2346 = vpop.f32.mrf.mxu0
      %v2347 = vadd.f32 0.0, %v2346
      %v2348 = vpop.f32.mrf.mxu0
      %2349 = vmatprep.mubr.f32.mxu0 0.0
      %2350 = vmatmul.mubr.f32.gmra.mxu0 %v2231
      %v2351 = vpop.f32.mrf.mxu0
      %v2352 = vadd.f32 0.0, %v2351
      %v2353 = vpop.f32.mrf.mxu0
      %2354 = vmatprep.mubr.f32.mxu0 0.0
      %2355 = vmatmul.mubr.f32.gmra.mxu0 %v2234
      %v2356 = vpop.f32.mrf.mxu0
      %v2357 = vadd.f32 0.0, %v2356
      %v2358 = vpop.f32.mrf.mxu0
      %2359 = vmatprep.mubr.f32.mxu0 0.0
      %2360 = vmatmul.mubr.f32.gmra.mxu0 %v2237
      %v2361 = vpop.f32.mrf.mxu0
      %v2362 = vadd.f32 0.0, %v2361
      %v2363 = vpop.f32.mrf.mxu0
      %2364 = vmatprep.mubr.f32.mxu0 0.0
      %2365 = vmatmul.mubr.f32.gmra.mxu0 %v2240
      %v2366 = vpop.f32.mrf.mxu0
      %v2367 = vadd.f32 0.0, %v2366
      %v2368 = vpop.f32.mrf.mxu0
      %2369 = vmatprep.mubr.f32.mxu0 0.0
      %2370 = vmatmul.mubr.f32.gmra.mxu0 %v2243
      %v2371 = vpop.f32.mrf.mxu0
      %v2372 = vadd.f32 0.0, %v2371
      %v2373 = vpop.f32.mrf.mxu0
      %2374 = vmatprep.mubr.f32.mxu0 0.0
      %2375 = vmatmul.mubr.f32.gmra.mxu0 %v2246
      %v2376 = vpop.f32.mrf.mxu0
      %v2377 = vadd.f32 0.0, %v2376
      %v2378 = vpop.f32.mrf.mxu0
      %2379 = vmatprep.mubr.f32.mxu0 0.0
      %2380 = vmatmul.mubr.f32.gmra.mxu0 %v2249
      %v2381 = vpop.f32.mrf.mxu0
      %v2382 = vadd.f32 0.0, %v2381
      %v2383 = vpop.f32.mrf.mxu0
      %2384 = vmatprep.mubr.f32.mxu0 0.0
      %2385 = vmatmul.mubr.f32.gmra.mxu0 %v2252
      %v2386 = vpop.f32.mrf.mxu0
      %v2387 = vadd.f32 0.0, %v2386
      %v2388 = vpop.f32.mrf.mxu0
      %2389 = vmatprep.mubr.f32.mxu0 0.0
      %2390 = vmatmul.mubr.f32.gmra.mxu0 %v2255
      %v2391 = vpop.f32.mrf.mxu0
      %v2392 = vadd.f32 0.0, %v2391
      %v2393 = vpop.f32.mrf.mxu0
      %2394 = vmatprep.mubr.f32.mxu0 0.0
      %2395 = vmatmul.mubr.f32.gmra.mxu0 %v2258
      %v2396 = vpop.f32.mrf.mxu0
      %v2397 = vadd.f32 0.0, %v2396
      %v2398 = vpop.f32.mrf.mxu0
      %2399 = vmatprep.mubr.f32.mxu0 0.0
      %2400 = vmatmul.mubr.f32.gmra.mxu0 %v2261
      %v2401 = vpop.f32.mrf.mxu0
      %v2402 = vadd.f32 0.0, %v2401
      %v2403 = vpop.f32.mrf.mxu0
      %2404 = vmatprep.mubr.f32.mxu0 0.0
      %2405 = vmatmul.mubr.f32.gmra.mxu0 %v2264
      %v2406 = vpop.f32.mrf.mxu0
      %v2407 = vadd.f32 0.0, %v2406
      %v2408 = vpop.f32.mrf.mxu0
      %2409 = vmatprep.mubr.f32.mxu0 0.0
      %2410 = vmatmul.mubr.f32.gmra.mxu0 %v2267
      %v2411 = vpop.f32.mrf.mxu0
      %v2412 = vadd.f32 0.0, %v2411
      %v2413 = vpop.f32.mrf.mxu0
      %2414 = vmatprep.mubr.f32.mxu0 0.0
      %2415 = vmatmul.mubr.f32.gmra.mxu0 %v2270
      %v2416 = vpop.f32.mrf.mxu0
      %v2417 = vadd.f32 0.0, %v2416
      %v2418 = vpop.f32.mrf.mxu0
      %2419 = vdwg.mxu0
      %v2420 = vadd.f32 %v2188, %v2342
      %v2421 = vadd.f32 %v2189, %v2347
      %v2422 = vadd.f32 %v2190, %v2352
      %v2423 = vadd.f32 %v2191, %v2357
      %v2424 = vadd.f32 %v2192, %v2362
      %v2425 = vadd.f32 %v2193, %v2367
      %v2426 = vadd.f32 %v2194, %v2372
      %v2427 = vadd.f32 %v2195, %v2377
      %v2428 = vadd.f32 %v2196, %v2382
      %v2429 = vadd.f32 %v2197, %v2387
      %v2430 = vadd.f32 %v2198, %v2392
      %v2431 = vadd.f32 %v2199, %v2397
      %v2432 = vadd.f32 %v2200, %v2402
      %v2433 = vadd.f32 %v2201, %v2407
      %v2434 = vadd.f32 %v2202, %v2412
      %v2435 = vadd.f32 %v2203, %v2417
      %s2436 = sadd.s32 %s1972, 576
      %s2437 = scalar_lea.vmem [#allocation2], %s2436
      %v2438 = vld [vmem:[%s2437] sm:$0xff]
      %v2439 = vld [vmem:[%s2437 + $0x8] sm:$0xff]
      %v2440 = vld [vmem:[%s2437 + $0x10] sm:$0xff]
      %v2441 = vld [vmem:[%s2437 + $0x18] sm:$0xff]
      %v2442 = vld [vmem:[%s2437 + $0x20] sm:$0xff]
      %v2443 = vld [vmem:[%s2437 + $0x28] sm:$0xff]
      %v2444 = vld [vmem:[%s2437 + $0x30] sm:$0xff]
      %v2445 = vld [vmem:[%s2437 + $0x38] sm:$0xff]
      %v2446 = vld [vmem:[%s2437 + $0x40] sm:$0xff]
      %v2447 = vld [vmem:[%s2437 + $0x48] sm:$0xff]
      %v2448 = vld [vmem:[%s2437 + $0x50] sm:$0xff]
      %v2449 = vld [vmem:[%s2437 + $0x58] sm:$0xff]
      %v2450 = vld [vmem:[%s2437 + $0x60] sm:$0xff]
      %v2451 = vld [vmem:[%s2437 + $0x68] sm:$0xff]
      %v2452 = vld [vmem:[%s2437 + $0x70] sm:$0xff]
      %v2453 = vld [vmem:[%s2437 + $0x78] sm:$0xff]
      %s2454 = scalar_lea.vmem %s1, 32
      %v2455 = vld [vmem:[%s2454] sm:$0xf]
      %v2457 = vsel %vm596, %v2438, 0
      %v2460 = vsel %vm596, %v2439, 0
      %v2463 = vsel %vm596, %v2440, 0
      %v2466 = vsel %vm596, %v2441, 0
      %v2469 = vsel %vm596, %v2442, 0
      %v2472 = vsel %vm596, %v2443, 0
      %v2475 = vsel %vm596, %v2444, 0
      %v2478 = vsel %vm596, %v2445, 0
      %v2481 = vsel %vm596, %v2446, 0
      %v2484 = vsel %vm596, %v2447, 0
      %v2487 = vsel %vm596, %v2448, 0
      %v2490 = vsel %vm596, %v2449, 0
      %v2493 = vsel %vm596, %v2450, 0
      %v2496 = vsel %vm596, %v2451, 0
      %v2499 = vsel %vm596, %v2452, 0
      %v2502 = vsel %vm596, %v2453, 0
      %v2505 = vsel %vm645, %v2455, 0
      %2507 = vmatprep.subr.mxu0 0.0
      %2508 = vmatpush1.msra.mxu0 0.0
      %2509 = vmatprep.subr.mxu0 0.0
      %2510 = vmatpush1.msra.mxu0 0.0
      %2511 = vmatprep.subr.mxu0 0.0
      %2512 = vmatpush1.msra.mxu0 0.0
      %2513 = vmatprep.subr.mxu0 0.0
      %2514 = vmatpush1.msra.mxu0 0.0
      %2515 = vmatprep.subr.mxu0 0.0
      %2516 = vmatpush1.msra.mxu0 0.0
      %2517 = vmatprep.subr.mxu0 0.0
      %2518 = vmatpush1.msra.mxu0 0.0
      %2519 = vmatprep.subr.mxu0 0.0
      %2520 = vmatpush1.msra.mxu0 0.0
      %2521 = vmatprep.subr.mxu0 0.0
      %2522 = vmatpush1.msra.mxu0 0.0
      %2523 = vmatprep.subr.mxu0 0.0
      %2524 = vmatpush1.msra.mxu0 0.0
      %2525 = vmatprep.subr.mxu0 0.0
      %2526 = vmatpush1.msra.mxu0 0.0
      %2527 = vmatprep.subr.mxu0 0.0
      %2528 = vmatpush1.msra.mxu0 0.0
      %2529 = vmatprep.subr.mxu0 0.0
      %2530 = vmatpush1.msra.mxu0 0.0
      %2531 = vmatprep.subr.mxu0 0.0
      %2532 = vmatpush1.msra.mxu0 0.0
      %2533 = vmatprep.subr.mxu0 0.0
      %2534 = vmatpush1.msra.mxu0 0.0
      %2535 = vmatprep.subr.mxu0 0.0
      %2536 = vmatpush1.msra.mxu0 0.0
      %2537 = vmatprep.subr.mxu0 0.0
      %2538 = vmatpush1.msra.mxu0 %v2505
      %2539 = vmatprep.subr.mxu0 0.0
      %2540 = vmatpush2.msra.mxu0 0.0
      %2541 = vmatprep.subr.mxu0 0.0
      %2542 = vmatpush2.msra.mxu0 0.0
      %2543 = vmatprep.subr.mxu0 0.0
      %2544 = vmatpush2.msra.mxu0 0.0
      %2545 = vmatprep.subr.mxu0 0.0
      %2546 = vmatpush2.msra.mxu0 0.0
      %2547 = vmatprep.subr.mxu0 0.0
      %2548 = vmatpush2.msra.mxu0 0.0
      %2549 = vmatprep.subr.mxu0 0.0
      %2550 = vmatpush2.msra.mxu0 0.0
      %2551 = vmatprep.subr.mxu0 0.0
      %2552 = vmatpush2.msra.mxu0 0.0
      %2553 = vmatprep.subr.mxu0 0.0
      %2554 = vmatpush2.msra.mxu0 0.0
      %2555 = vmatprep.subr.mxu0 0.0
      %2556 = vmatpush2.msra.mxu0 0.0
      %2557 = vmatprep.subr.mxu0 0.0
      %2558 = vmatpush2.msra.mxu0 0.0
      %2559 = vmatprep.subr.mxu0 0.0
      %2560 = vmatpush2.msra.mxu0 0.0
      %2561 = vmatprep.subr.mxu0 0.0
      %2562 = vmatpush2.msra.mxu0 0.0
      %2563 = vmatprep.subr.mxu0 0.0
      %2564 = vmatpush2.msra.mxu0 0.0
      %2565 = vmatprep.subr.mxu0 0.0
      %2566 = vmatpush2.msra.mxu0 0.0
      %2567 = vmatprep.subr.mxu0 0.0
      %2568 = vmatpush2.msra.mxu0 0.0
      %2569 = vmatprep.subr.mxu0 0.0
      %2570 = vmatpush2.msra.mxu0 0.0
      %2571 = vmatprep.mubr.f32.mxu0 0.0
      %2572 = vmatmul.mubr.f32.gmra.mxu0 %v2457
      %v2573 = vpop.f32.mrf.mxu0
      %v2574 = vadd.f32 0.0, %v2573
      %v2575 = vpop.f32.mrf.mxu0
      %2576 = vmatprep.mubr.f32.mxu0 0.0
      %2577 = vmatmul.mubr.f32.gmra.mxu0 %v2460
      %v2578 = vpop.f32.mrf.mxu0
      %v2579 = vadd.f32 0.0, %v2578
      %v2580 = vpop.f32.mrf.mxu0
      %2581 = vmatprep.mubr.f32.mxu0 0.0
      %2582 = vmatmul.mubr.f32.gmra.mxu0 %v2463
      %v2583 = vpop.f32.mrf.mxu0
      %v2584 = vadd.f32 0.0, %v2583
      %v2585 = vpop.f32.mrf.mxu0
      %2586 = vmatprep.mubr.f32.mxu0 0.0
      %2587 = vmatmul.mubr.f32.gmra.mxu0 %v2466
      %v2588 = vpop.f32.mrf.mxu0
      %v2589 = vadd.f32 0.0, %v2588
      %v2590 = vpop.f32.mrf.mxu0
      %2591 = vmatprep.mubr.f32.mxu0 0.0
      %2592 = vmatmul.mubr.f32.gmra.mxu0 %v2469
      %v2593 = vpop.f32.mrf.mxu0
      %v2594 = vadd.f32 0.0, %v2593
      %v2595 = vpop.f32.mrf.mxu0
      %2596 = vmatprep.mubr.f32.mxu0 0.0
      %2597 = vmatmul.mubr.f32.gmra.mxu0 %v2472
      %v2598 = vpop.f32.mrf.mxu0
      %v2599 = vadd.f32 0.0, %v2598
      %v2600 = vpop.f32.mrf.mxu0
      %2601 = vmatprep.mubr.f32.mxu0 0.0
      %2602 = vmatmul.mubr.f32.gmra.mxu0 %v2475
      %v2603 = vpop.f32.mrf.mxu0
      %v2604 = vadd.f32 0.0, %v2603
      %v2605 = vpop.f32.mrf.mxu0
      %2606 = vmatprep.mubr.f32.mxu0 0.0
      %2607 = vmatmul.mubr.f32.gmra.mxu0 %v2478
      %v2608 = vpop.f32.mrf.mxu0
      %v2609 = vadd.f32 0.0, %v2608
      %v2610 = vpop.f32.mrf.mxu0
      %2611 = vmatprep.mubr.f32.mxu0 0.0
      %2612 = vmatmul.mubr.f32.gmra.mxu0 %v2481
      %v2613 = vpop.f32.mrf.mxu0
      %v2614 = vadd.f32 0.0, %v2613
      %v2615 = vpop.f32.mrf.mxu0
      %2616 = vmatprep.mubr.f32.mxu0 0.0
      %2617 = vmatmul.mubr.f32.gmra.mxu0 %v2484
      %v2618 = vpop.f32.mrf.mxu0
      %v2619 = vadd.f32 0.0, %v2618
      %v2620 = vpop.f32.mrf.mxu0
      %2621 = vmatprep.mubr.f32.mxu0 0.0
      %2622 = vmatmul.mubr.f32.gmra.mxu0 %v2487
      %v2623 = vpop.f32.mrf.mxu0
      %v2624 = vadd.f32 0.0, %v2623
      %v2625 = vpop.f32.mrf.mxu0
      %2626 = vmatprep.mubr.f32.mxu0 0.0
      %2627 = vmatmul.mubr.f32.gmra.mxu0 %v2490
      %v2628 = vpop.f32.mrf.mxu0
      %v2629 = vadd.f32 0.0, %v2628
      %v2630 = vpop.f32.mrf.mxu0
      %2631 = vmatprep.mubr.f32.mxu0 0.0
      %2632 = vmatmul.mubr.f32.gmra.mxu0 %v2493
      %v2633 = vpop.f32.mrf.mxu0
      %v2634 = vadd.f32 0.0, %v2633
      %v2635 = vpop.f32.mrf.mxu0
      %2636 = vmatprep.mubr.f32.mxu0 0.0
      %2637 = vmatmul.mubr.f32.gmra.mxu0 %v2496
      %v2638 = vpop.f32.mrf.mxu0
      %v2639 = vadd.f32 0.0, %v2638
      %v2640 = vpop.f32.mrf.mxu0
      %2641 = vmatprep.mubr.f32.mxu0 0.0
      %2642 = vmatmul.mubr.f32.gmra.mxu0 %v2499
      %v2643 = vpop.f32.mrf.mxu0
      %v2644 = vadd.f32 0.0, %v2643
      %v2645 = vpop.f32.mrf.mxu0
      %2646 = vmatprep.mubr.f32.mxu0 0.0
      %2647 = vmatmul.mubr.f32.gmra.mxu0 %v2502
      %v2648 = vpop.f32.mrf.mxu0
      %v2649 = vadd.f32 0.0, %v2648
      %v2650 = vpop.f32.mrf.mxu0
      %2651 = vdwg.mxu0
      %v2652 = vadd.f32 %v2420, %v2574
      %v2653 = vadd.f32 %v2421, %v2579
      %v2654 = vadd.f32 %v2422, %v2584
      %v2655 = vadd.f32 %v2423, %v2589
      %v2656 = vadd.f32 %v2424, %v2594
      %v2657 = vadd.f32 %v2425, %v2599
      %v2658 = vadd.f32 %v2426, %v2604
      %v2659 = vadd.f32 %v2427, %v2609
      %v2660 = vadd.f32 %v2428, %v2614
      %v2661 = vadd.f32 %v2429, %v2619
      %v2662 = vadd.f32 %v2430, %v2624
      %v2663 = vadd.f32 %v2431, %v2629
      %v2664 = vadd.f32 %v2432, %v2634
      %v2665 = vadd.f32 %v2433, %v2639
      %v2666 = vadd.f32 %v2434, %v2644
      %v2667 = vadd.f32 %v2435, %v2649
      %v2668 = vmax.f32 %v2652, 0.0
      %v2669 = vmax.f32 %v2653, 0.0
      %v2670 = vmax.f32 %v2654, 0.0
      %v2671 = vmax.f32 %v2655, 0.0
      %v2672 = vmax.f32 %v2656, 0.0
      %v2673 = vmax.f32 %v2657, 0.0
      %v2674 = vmax.f32 %v2658, 0.0
      %v2675 = vmax.f32 %v2659, 0.0
      %v2676 = vmax.f32 %v2660, 0.0
      %v2677 = vmax.f32 %v2661, 0.0
      %v2678 = vmax.f32 %v2662, 0.0
      %v2679 = vmax.f32 %v2663, 0.0
      %v2680 = vmax.f32 %v2664, 0.0
      %v2681 = vmax.f32 %v2665, 0.0
      %v2682 = vmax.f32 %v2666, 0.0
      %v2683 = vmax.f32 %v2667, 0.0
      %2684 = vst.msk [vmem:[%s194] sm:$0xff] %vm596, %v2668
      %2685 = vst.msk [vmem:[%s194 + $0x8] sm:$0xff] %vm596, %v2669
      %2686 = vst.msk [vmem:[%s194 + $0x10] sm:$0xff] %vm596, %v2670
      %2687 = vst.msk [vmem:[%s194 + $0x18] sm:$0xff] %vm596, %v2671
      %2688 = vst.msk [vmem:[%s194 + $0x20] sm:$0xff] %vm596, %v2672
      %2689 = vst.msk [vmem:[%s194 + $0x28] sm:$0xff] %vm596, %v2673
      %2690 = vst.msk [vmem:[%s194 + $0x30] sm:$0xff] %vm596, %v2674
      %2691 = vst.msk [vmem:[%s194 + $0x38] sm:$0xff] %vm596, %v2675
      %2692 = vst.msk [vmem:[%s194 + $0x40] sm:$0xff] %vm596, %v2676
      %2693 = vst.msk [vmem:[%s194 + $0x48] sm:$0xff] %vm596, %v2677
      %2694 = vst.msk [vmem:[%s194 + $0x50] sm:$0xff] %vm596, %v2678
      %2695 = vst.msk [vmem:[%s194 + $0x58] sm:$0xff] %vm596, %v2679
      %2696 = vst.msk [vmem:[%s194 + $0x60] sm:$0xff] %vm596, %v2680
      %2697 = vst.msk [vmem:[%s194 + $0x68] sm:$0xff] %vm596, %v2681
      %2698 = vst.msk [vmem:[%s194 + $0x70] sm:$0xff] %vm596, %v2682
      %2699 = vst.msk [vmem:[%s194 + $0x78] sm:$0xff] %vm596, %v2683
      %s2700 = smul.u32 8, %s19
      %p2701 = scmp.lt.s32.totalorder %s18, 1
      %s2702 = scalar_select %p2701, %s18, 1
      %p2703 = scmp.lt.s32.totalorder %s2700, 15
      %s2704 = scalar_select %p2703, %s2700, 15
      %s2705 = smul.addr %s2704, 2
      %s2706 = smul.addr %s2702, 32
      %s2707 = sadd.s32 %s2705, %s2706
      %s2708 = smul.addr %s2707, 8
      %s2709 = scalar_lea.vmem %s3, %s2708
      // Predicated region
      $region37: #{tpu_custom_call.1} parent=31 // pred_check
        %p2710 = pneg %p114
      $region38: #{tpu_custom_call.1} parent=31 // pred_check_branch
        %2712 = sbr.rel (%p2710) target = $region40
      $region39: #{tpu_custom_call.1} parent=31 // pred_region
        %s2713 = smul.u32 8, %s19
      $region40: #{tpu_custom_call.1} parent=31 // pred_fallthru
        _
    $region32: #{tpu_custom_call.1} parent=5 // pred_fallthru
      _
    %p2714 = scmp.le.s32.totalorder 2, %s9
    // Predicated region
    $region41: #{tpu_custom_call.1} parent=5 // pred_check
      %p2715 = pneg %p2714
    $region42: #{tpu_custom_call.1} parent=5 // pred_check_branch
      %2717 = sbr.rel (%p2715) target = $region44
    $region43: #{tpu_custom_call.1} parent=5 // pred_region
      %s2718 = ssub.s32 %s9, 2
      // Predicated region
      $region45: #{tpu_custom_call.1} parent=43 // pred_check
        %p2719 = pneg %p120
      $region46: #{tpu_custom_call.1} parent=43 // pred_check_branch
        %2721 = sbr.rel (%p2719) target = $region48
      $region47: #{tpu_custom_call.1} parent=43 // pred_region
        %s2722 = smul.u32 8, %s21
        %p2723 = scmp.lt.s32.totalorder %s20, 1
        %s2724 = scalar_select %p2723, %s20, 1
        %p2725 = scmp.lt.s32.totalorder %s2722, 15
        %s2726 = scalar_select %p2725, %s2722, 15
        %s2727 = smul.addr %s2726, 2
        %s2728 = smul.addr %s2724, 32
        %s2729 = sadd.s32 %s2727, %s2728
        %s2730 = smul.addr %s2729, 8
        %s2731 = scalar_lea.vmem %s3, %s2730
      $region48: #{tpu_custom_call.1} parent=43 // pred_fallthru
        _
    $region44: #{tpu_custom_call.1} parent=5 // pred_fallthru
      _
  $region6: #{tpu_custom_call.1} parent=0 // loop_footer
    %s13 = sadd.s32 1, %s9
  $region7: #{tpu_custom_call.1} parent=0 // loop_footer_branch
    %8 = sbr.rel target = $region3
  $region8: #{tpu_custom_call.1} parent=0 // loop_exit
    _

</llo_original>
